<compile_context>
chip_gen: v5e
topology: v5e:2x2
jax: 0.10.0
libtpu: 0.0.40
codegen_flags: <defaults>
</compile_context>

<pallas_src>
import jax
import jax.numpy as jnp
from jax.experimental import pallas as pl
from jax.experimental.pallas import tpu as pltpu


# Below this many bytes the kernel launch + per-step overhead dominates and a
# plain XLA clip is already at the HBM roofline.
_SMALL_INPUT_BYTES = 256 * 1024
# Lane-dense column width cap (wide unmasked vst, but small enough that a
# divisor is usually found and the row tile stays flexible).
_MAX_COL = 4096
# ~2 MiB blocks: amortizes the ~0.35 us per-grid-step overhead; with input +
# output double-buffered that is ~8 MiB live VMEM, under every generation's
# default scoped budget (16 MiB v5e, 32 MiB v6e/v7x).
_TARGET_BLOCK_BYTES = 2 * 1024 * 1024


def _trelu_kernel(bounds_ref, x_ref, o_ref):
    # bounds live in SMEM: two scalar reads per grid step, free relative to
    # the HBM-bound streaming loop.  The clamp runs entirely on the VPU.
    lo = bounds_ref[0]
    hi = bounds_ref[1]
    o_ref[...] = jnp.clip(x_ref[...], lo, hi).astype(o_ref.dtype)


def _round_up(n, m):
    return ((n + m - 1) // m) * m


def trelu(x, lower=0.0, upper=1.0):
    """Apply clip(x, lower, upper) (TReLU.forward) via a Pallas TPU kernel.

    x: array of any shape (e.g. NCHW). Returns the same shape/dtype.
    """
    orig_shape = x.shape
    dtype = x.dtype
    total = x.size
    if total == 0:
        return x

    itemsize = jnp.dtype(dtype).itemsize

    # Small inputs: pure launch overhead territory -> fused XLA clip.
    if total * itemsize < _SMALL_INPUT_BYTES:
        return jnp.clip(x, lower, upper).astype(dtype)

    # Bounds dtype: keep integers exact for integer inputs, f32 otherwise.
    if jnp.issubdtype(dtype, jnp.floating):
        bdtype = jnp.float32
    elif jnp.issubdtype(dtype, jnp.integer):
        bdtype = jnp.int32
    else:
        return jnp.clip(x, lower, upper).astype(dtype)

    # Copy-free lane-dense layout: largest col (multiple of 128, <= _MAX_COL)
    # that exactly divides the flattened size.
    col = 0
    start = (min(total, _MAX_COL) // 128) * 128
    for cand in range(start, 0, -128):
        if total % cand == 0:
            col = cand
            break
    if col == 0:
        # total is not a multiple of 128: no copy-free 2-D view exists, and a
        # pad/slice (or split+concat) path costs more HBM traffic than the
        # kernel itself.  XLA's fused clip is already at roofline here.
        return jnp.clip(x, lower, upper).astype(dtype)

    rows = total // col

    # dtype-aware sublane multiple: 8 (f32), 16 (bf16/f16), 32 (int8/fp8).
    sublane = max(8, 32 // itemsize)
    row_tile = max(sublane,
                   (_TARGET_BLOCK_BYTES // (col * itemsize)) // sublane * sublane)
    # Don't over-tile: cap at the (sublane-rounded) row count.
    row_tile = min(row_tile, _round_up(rows, sublane))

    # Ragged last block: Pallas masks out-of-bounds writes of edge blocks, so
    # no padding of the array itself is needed.
    grid = (pl.cdiv(rows, row_tile),)

    x2 = x.reshape(rows, col)          # free view of a contiguous array
    bounds = jnp.asarray([lower, upper], dtype=bdtype)

    out2 = pl.pallas_call(
        _trelu_kernel,
        out_shape=jax.ShapeDtypeStruct((rows, col), dtype),
        grid=grid,
        in_specs=[
            pl.BlockSpec(memory_space=pltpu.MemorySpace.SMEM),     # bounds
            pl.BlockSpec((row_tile, col), lambda i: (i, 0)),       # x tile
        ],
        out_specs=pl.BlockSpec((row_tile, col), lambda i: (i, 0)),
        compiler_params=pltpu.CompilerParams(
            # "parallel" lets the grid axis shard across TCs on multi-core
            # parts (v7x); harmless elsewhere.
            dimension_semantics=("parallel",),
        ),
    )(bounds, x2)

    return out2.reshape(orig_shape)


if __name__ == "__main__":
    key = jax.random.PRNGKey(0)
    k0, k1, k2 = jax.random.split(key, 3)
    lower, upper = 0.0, 1.0

    # 1) Module-spec shape: NCHW, batch=2, channels=4, spatial=16x16 (tiny ->
    #    served by the small-input fast path, matching torch.clip semantics).
    x_small = jax.random.normal(k0, (2, 4, 16, 16), dtype=jnp.float32) * 2.0
    out_small = jax.block_until_ready(trelu(x_small, lower, upper))
    assert out_small.shape == x_small.shape and out_small.dtype == x_small.dtype
    assert jnp.allclose(out_small, jnp.clip(x_small, lower, upper))

    # 2) Larger f32 input exercising the Pallas path with a ragged last row
    #    block (rows=192, row_tile=128 -> 2 grid steps, last one partial).
    x_big = jax.random.normal(k1, (8, 16, 64, 96), dtype=jnp.float32) * 2.0
    out_big = jax.block_until_ready(trelu(x_big, lower, upper))
    assert out_big.shape == x_big.shape and out_big.dtype == x_big.dtype
    assert jnp.allclose(out_big, jnp.clip(x_big, lower, upper))

    # 3) bf16 input with non-default bounds (checks the SMEM-scalar bounds).
    x_bf16 = (jax.random.normal(k2, (4, 8, 128, 128), dtype=jnp.float32) * 2.0
              ).astype(jnp.bfloat16)
    out_bf16 = jax.block_until_ready(trelu(x_bf16, -0.5, 0.5))
    assert out_bf16.shape == x_bf16.shape and out_bf16.dtype == x_bf16.dtype
    assert jnp.allclose(out_bf16.astype(jnp.float32),
                        jnp.clip(x_bf16.astype(jnp.float32), -0.5, 0.5))

    print("KERNEL_OK")
</pallas_src>

<mosaic_0001>
module attributes {stable_mosaic.version = 11 : i64} {
  func.func @_trelu_kernel(%arg0: i32, %arg1: memref<2xf32, #tpu.memory_space<smem>>, %arg2: memref<128x4096xf32, #tpu.memory_space<vmem>>, %arg3: memref<128x4096xf32, #tpu.memory_space<vmem>>) attributes {dimension_semantics = [#tpu.dimension_semantics<parallel>], iteration_bounds = array<i64: 2>, scalar_prefetch = 0 : i64, scratch_operands = 0 : i64, tpu.core_type = #tpu.core_type<tc>, window_params = [{transform_indices = @transform_0, window_bounds = array<i64: 2>}, {transform_indices = @transform_1, window_bounds = array<i64: 128, 4096>}, {transform_indices = @transform_2, window_bounds = array<i64: 128, 4096>}]} {
    %c0 = arith.constant 0 : index
    %0 = memref.load %arg1[%c0] : memref<2xf32, #tpu.memory_space<smem>>
    %c1 = arith.constant 1 : index
    %1 = memref.load %arg1[%c1] : memref<2xf32, #tpu.memory_space<smem>>
    %c0_0 = arith.constant 0 : index
    %c0_1 = arith.constant 0 : index
    %2 = vector.load %arg2[%c0_0, %c0_1] : memref<128x4096xf32, #tpu.memory_space<vmem>>, vector<128x4096xf32>
    %3 = vector.broadcast %0 : f32 to vector<128x4096xf32>
    %4 = arith.maximumf %3, %2 : vector<128x4096xf32>
    %5 = vector.broadcast %1 : f32 to vector<128x4096xf32>
    %6 = arith.minimumf %5, %4 : vector<128x4096xf32>
    %c0_2 = arith.constant 0 : index
    %c0_3 = arith.constant 0 : index
    %7 = vector.load %arg3[%c0_2, %c0_3] : memref<128x4096xf32, #tpu.memory_space<vmem>>, vector<128x4096xf32>
    tpu.vector_store %arg3[%c0_2, %c0_3], %6 {strides = array<i32>} : memref<128x4096xf32, #tpu.memory_space<vmem>>, vector<128x4096xf32>,
    return
  }
  func.func @transform_0(%arg0: i32) -> i32 {
    %c0_i32 = arith.constant 0 : i32
    %c0_i32_0 = arith.constant 0 : i32
    return %c0_i32 : i32
  }
  func.func @transform_1(%arg0: i32) -> (i32, i32) {
    %c0_i32 = arith.constant 0 : i32
    %c0_i32_0 = arith.constant 0 : i32
    return %arg0, %c0_i32 : i32, i32
  }
  func.func @transform_2(%arg0: i32) -> (i32, i32) {
    %c0_i32 = arith.constant 0 : i32
    %c0_i32_0 = arith.constant 0 : i32
    return %arg0, %c0_i32 : i32, i32
  }
}

</mosaic_0001>

<llo_original>
// kernel: tpu_custom_call.1
$region0: #{tpu_custom_call.1}
  #allocation0 [shape = 'u32[]', space=smem, size = 0x4, offset = 0x4, fixed_abs, tag = 'smem constant byte address 0x4 - core index']
  #allocation1 [shape = 'u32[72,128]{1,0:T(1,128)}', space=vmem, size = 0x9000, scoped, tag = 'internal scratch']
  %s0 = inlined_call_operand.hbm [shape: f32[2], index: 0, kind: input, shape index: {}]
  %s1 = inlined_call_operand.hbm [shape: f32[192,4096], index: 1, kind: input, shape index: {}]
  %s2 = inlined_call_operand.hbm [shape: f32[192,4096], index: 2, kind: output, shape index: {}]
  %s3 = sld [smem:[#allocation0]]
  $region49: #{tpu_custom_call.1} parent=0
    _
  %s5 = ssub.s32 1, %s3
  %s6 = scalar_select 0, %s5, %s3
  $region1: #{tpu_custom_call.1} parent=0
    #allocation2 [shape = 'u8[512]{0}', space=smem, size = 0x200, scoped, tag = 'input window, operand 0, single buffered']
    #allocation3 [shape = 's32[2]{0}', space=sflag, size = 0x8, scoped, tag = 'scoped memory for tpu_custom_call.1']
    #allocation4 [shape = 's32[2]{0}', space=sflag, size = 0x8, scoped, tag = 'scoped memory for tpu_custom_call.1']
    #allocation5 [shape = 's32[2]{0}', space=sflag, size = 0x8, scoped, tag = 'scoped memory for tpu_custom_call.1']
    #allocation6 [shape = 'u8[4194304]{0}', space=vmem, size = 0x400000, scoped, tag = 'input window, operand 1']
    #allocation7 [shape = 'u8[4194304]{0}', space=vmem, size = 0x400000, scoped, tag = 'output window, operand 0']
    %7 = vsyncpa [#allocation5], 0
    %8 = vsyncpa [#allocation3], 0
    %s9 = scalar_lea.sflag [#allocation3], 1
    %10 = vsyncpa %s9, 0
    %11 = vsyncpa [#allocation4], 0
    %s12 = scalar_lea.sflag [#allocation4], 1
    %13 = vsyncpa %s12, 0
    loop: start=0, step=1, limit=4
    $region2: #{tpu_custom_call.1} parent=1 // loop_pre_header
      _
    $region3: #{tpu_custom_call.1} parent=1 // loop_header
      %s15 = sphi 0, %s19
      %p16 = scmp.ge.s32.totalorder %s15, 4
      %s23 = sphi 0, %s23
      %s25 = sphi 0, %s23
      %s26 = sphi 0, %s25
      %s40 = sphi 0, %s26
      %s46 = sphi 0, %s48
      %s49 = sphi 0, %s46
      %s50 = sphi 0, %s49
      %s66 = sphi 0, %s50
      %s72 = sphi 0, %s74
      %s75 = sphi 0, %s72
      %s76 = sphi 0, %s75
      %s92 = sphi 0, %s76
    $region4: #{tpu_custom_call.1} parent=1 // loop_header_branch
      %18 = sbr.rel (%p16) target = $region8
    $region5: #{tpu_custom_call.1} parent=1 // loop_body
      %s20 = ssub.s32 %s15, 1
      %s21 = ssub.s32 %s15, 2
      %s22 = sadd.s32 %s15, 1
      %s24 = sadd.s32 %s23, 1
      %p27 = scmp.eq.s32.totalorder %s15, 1
      %p28 = scmp.ne.s32.totalorder %s23, %s25
      %p29 = scmp.eq.s32.totalorder %s15, 0
      %p30 = por %p28, %p29
      %p31 = scmp.ne.s32.totalorder %s23, %s25
      %p32 = scmp.eq.s32.totalorder %s20, 1
      %p33 = por %p31, %p32
      %p34 = scmp.ne.s32.totalorder %s25, %s26
      %p35 = scmp.eq.s32.totalorder %s20, 0
      %p36 = por %p34, %p35
      %p37 = scmp.ne.s32.totalorder %s25, %s26
      %p38 = scmp.eq.s32.totalorder %s21, 1
      %p39 = por %p37, %p38
      %p41 = scmp.ne.s32.totalorder %s26, %s40
      %p42 = scmp.eq.s32.totalorder %s21, 0
      %p43 = por %p41, %p42
      %s44 = ssub.s32 %s15, %s22
      %p45 = scmp.eq.s32.totalorder %s44, 0
      %s47 = sadd.s32 %s46, 1
      %s48 = scalar_select %p45, %s46, %s47
      %p51 = pneg %p45
      %p52 = scmp.eq.s32.totalorder %s15, 1
      %p53 = por %p51, %p52
      %p54 = scmp.ne.s32.totalorder %s46, %s49
      %p55 = scmp.eq.s32.totalorder %s15, 0
      %p56 = por %p54, %p55
      %p57 = scmp.ne.s32.totalorder %s46, %s49
      %p58 = scmp.eq.s32.totalorder %s20, 1
      %p59 = por %p57, %p58
      %p60 = scmp.ne.s32.totalorder %s49, %s50
      %p61 = scmp.eq.s32.totalorder %s20, 0
      %p62 = por %p60, %p61
      %p63 = scmp.ne.s32.totalorder %s49, %s50
      %p64 = scmp.eq.s32.totalorder %s21, 1
      %p65 = por %p63, %p64
      %p67 = scmp.ne.s32.totalorder %s50, %s66
      %p68 = scmp.eq.s32.totalorder %s21, 0
      %p69 = por %p67, %p68
      %s70 = ssub.s32 %s15, %s22
      %p71 = scmp.eq.s32.totalorder %s70, 0
      %s73 = sadd.s32 %s72, 1
      %s74 = scalar_select %p71, %s72, %s73
      %p77 = pneg %p71
      %p78 = scmp.eq.s32.totalorder %s15, 1
      %p79 = por %p77, %p78
      %p80 = scmp.ne.s32.totalorder %s72, %s75
      %p81 = scmp.eq.s32.totalorder %s15, 0
      %p82 = por %p80, %p81
      %p83 = scmp.ne.s32.totalorder %s72, %s75
      %p84 = scmp.eq.s32.totalorder %s20, 1
      %p85 = por %p83, %p84
      %p86 = scmp.ne.s32.totalorder %s75, %s76
      %p87 = scmp.eq.s32.totalorder %s20, 0
      %p88 = por %p86, %p87
      %p89 = scmp.ne.s32.totalorder %s75, %s76
      %p90 = scmp.eq.s32.totalorder %s21, 1
      %p91 = por %p89, %p90
      %p93 = scmp.ne.s32.totalorder %s76, %s92
      %p94 = scmp.eq.s32.totalorder %s21, 0
      %p95 = por %p93, %p94
      %p96 = scmp.le.s32.totalorder 1, %s15
      %p97 = scmp.lt.s32.totalorder %s15, 3
      %p98 = pnand %p96, %p97
      %p99 = pneg %p98
      // Predicated region
      $region9: #{tpu_custom_call.1} parent=5 // pred_check
        _
      $region10: #{tpu_custom_call.1} parent=5 // pred_check_branch
        %101 = sbr.rel (%p98) target = $region12
      $region11: #{tpu_custom_call.1} parent=5 // pred_region
        %s102 = ssub.s32 %s15, 1
        // Predicated region
        $region13: #{tpu_custom_call.1} parent=11 // pred_check
          %p103 = pneg %p36
        $region14: #{tpu_custom_call.1} parent=11 // pred_check_branch
          %105 = sbr.rel (%p103) target = $region16
        $region15: #{tpu_custom_call.1} parent=11 // pred_region
          %107 = vsyncadd [#allocation5], 0
          %s109 = sshll.u32 %s0, 4
          %s110 = int_to_ptr.hbm [resolvable:$true] %s109
          %112 = dma.hbm_to_smem %s110, 16, [#allocation2], [#allocation5]
        $region16: #{tpu_custom_call.1} parent=11 // pred_fallthru
          _
      $region12: #{tpu_custom_call.1} parent=5 // pred_fallthru
        _
      %p113 = scmp.lt.s32.totalorder %s15, 2
      // Predicated region
      $region17: #{tpu_custom_call.1} parent=5 // pred_check
        %p114 = pneg %p113
      $region18: #{tpu_custom_call.1} parent=5 // pred_check_branch
        %116 = sbr.rel (%p114) target = $region20
      $region19: #{tpu_custom_call.1} parent=5 // pred_region
        // Predicated region
        $region21: #{tpu_custom_call.1} parent=19 // pred_check
          %p117 = pneg %p56
        $region22: #{tpu_custom_call.1} parent=19 // pred_check_branch
          %119 = sbr.rel (%p117) target = $region24
        $region23: #{tpu_custom_call.1} parent=19 // pred_region
          %s120 = sand.u32 %s46, 1
          %s121 = scalar_lea.sflag [#allocation3], %s120
          %s122 = sand.u32 %s46, 1
          %s123 = smul.addr %s122, 4096
          %s124 = scalar_lea.vmem [#allocation6], %s123
          %s125 = smul.u32 16, %s15
          %s126 = ssub.s32 24, %s125
          %p127 = scmp.lt.s32.totalorder %s126, 16
          %s128 = scalar_select %p127, %s126, 16
          %s129 = smul.u32 8, %s128
          %s130 = smul.u32 %s129, 32
          %s131 = ssub.s32 4096, %s130
          %s132 = sshll.u32 %s131, 4
          %133 = vsyncadd %s121, %s132
          %p134 = scmp.ne.s32.totalorder 0, %s130
          %s135 = smul.addr %s125, 32
          %s136 = smul.addr %s135, 8
          %s137 = scalar_lea.hbm %s1, %s136
          %s138 = smul.u32 256, %s128
          %s139 = sshll.u32 %s137, 4
          %s140 = int_to_ptr.hbm [resolvable:$true] %s139
          %s141 = sshll.u32 %s124, 4
          %s142 = int_to_ptr.vmem [resolvable:$true] %s141
          %s143 = sshll.u32 %s138, 4
          %147 = dma.hbm_to_vmem [thread:$0]  (%p134), %s140, %s143, %s142, %s121, 4096, 4096, 256
        $region24: #{tpu_custom_call.1} parent=19 // pred_fallthru
          _
      $region20: #{tpu_custom_call.1} parent=5 // pred_fallthru
        _
      %p148 = scmp.le.s32.totalorder 1, %s15
      %p149 = scmp.lt.s32.totalorder %s15, 3
      %p150 = pnand %p148, %p149
      %p151 = pneg %p150
      // Predicated region
      $region25: #{tpu_custom_call.1} parent=5 // pred_check
        _
      $region26: #{tpu_custom_call.1} parent=5 // pred_check_branch
        %153 = sbr.rel (%p150) target = $region28
      $region27: #{tpu_custom_call.1} parent=5 // pred_region
        %s154 = ssub.s32 %s15, 1
        // Predicated region
        $region29: #{tpu_custom_call.1} parent=27 // pred_check
          %p155 = pneg %p36
        $region30: #{tpu_custom_call.1} parent=27 // pred_check_branch
          %157 = sbr.rel (%p155) target = $region32
        $region31: #{tpu_custom_call.1} parent=27 // pred_region
          %159 = dma.done [#allocation5], 16
        $region32: #{tpu_custom_call.1} parent=27 // pred_fallthru
          _
        %s160 = sand.u32 %s49, 1
        %s161 = scalar_lea.sflag [#allocation3], %s160
        %s162 = sand.u32 %s49, 1
        %s163 = smul.addr %s162, 4096
        %s164 = scalar_lea.vmem [#allocation6], %s163
        // Predicated region
        $region33: #{tpu_custom_call.1} parent=27 // pred_check
          %p165 = pneg %p62
        $region34: #{tpu_custom_call.1} parent=27 // pred_check_branch
          %167 = sbr.rel (%p165) target = $region36
        $region35: #{tpu_custom_call.1} parent=27 // pred_region
          %169 = dma.done %s161, 65536
        $region36: #{tpu_custom_call.1} parent=27 // pred_fallthru
          _
        %170 = sfence
        %p171 = pneg %p36
        %p172 = pneg %p33
        %s173 = sand.u32 %s49, 1
        %s174 = scalar_lea.sflag [#allocation3], %s173
        %s175 = sand.u32 %s49, 1
        %s176 = smul.addr %s175, 4096
        %s177 = scalar_lea.vmem [#allocation6], %s176
        %p178 = pneg %p62
        %p179 = pneg %p59
        %p180 = pneg %p88
        %p181 = pneg %p85
        %s182 = sand.u32 %s75, 1
        %s183 = scalar_lea.sflag [#allocation4], %s182
        %s184 = sand.u32 %s75, 1
        %s185 = smul.addr %s184, 4096
        %s186 = scalar_lea.vmem [#allocation7], %s185
        %s187 = smul.u32 16, %s20
        %s188 = ssub.s32 24, %s187
        %p189 = scmp.lt.s32.totalorder %s188, 16
        %s190 = scalar_select %p189, %s188, 16
        %s191 = smul.u32 8, %s190
        %s192 = smul.u32 %s191, 32
        %s193 = smul.u32 16, %s20
        %s194 = ssub.s32 24, %s193
        %p195 = scmp.lt.s32.totalorder %s194, 16
        %s196 = scalar_select %p195, %s194, 16
        %s197 = smul.u32 8, %s196
        %s198 = smul.u32 %s197, 32
        %s199 = sld [smem:[#allocation2]]
        %s200 = sld [smem:[#allocation2 + $0x1]]
        %v201 = vld [vmem:[%s164] sm:$0xff]
        %v202 = vld [vmem:[%s164 + $0x8] sm:$0xff]
        %v203 = vld [vmem:[%s164 + $0x10] sm:$0xff]
        %v204 = vld [vmem:[%s164 + $0x18] sm:$0xff]
        %v205 = vld [vmem:[%s164 + $0x20] sm:$0xff]
        %v206 = vld [vmem:[%s164 + $0x28] sm:$0xff]
        %v207 = vld [vmem:[%s164 + $0x30] sm:$0xff]
        %v208 = vld [vmem:[%s164 + $0x38] sm:$0xff]
        %v209 = vld [vmem:[%s164 + $0x40] sm:$0xff]
        %v210 = vld [vmem:[%s164 + $0x48] sm:$0xff]
        %v211 = vld [vmem:[%s164 + $0x50] sm:$0xff]
        %v212 = vld [vmem:[%s164 + $0x58] sm:$0xff]
        %v213 = vld [vmem:[%s164 + $0x60] sm:$0xff]
        %v214 = vld [vmem:[%s164 + $0x68] sm:$0xff]
        %v215 = vld [vmem:[%s164 + $0x70] sm:$0xff]
        %v216 = vld [vmem:[%s164 + $0x78] sm:$0xff]
        %v217 = vld [vmem:[%s164 + $0x80] sm:$0xff]
        %v218 = vld [vmem:[%s164 + $0x88] sm:$0xff]
        %v219 = vld [vmem:[%s164 + $0x90] sm:$0xff]
        %v220 = vld [vmem:[%s164 + $0x98] sm:$0xff]
        %v221 = vld [vmem:[%s164 + $0xa0] sm:$0xff]
        %v222 = vld [vmem:[%s164 + $0xa8] sm:$0xff]
        %v223 = vld [vmem:[%s164 + $0xb0] sm:$0xff]
        %v224 = vld [vmem:[%s164 + $0xb8] sm:$0xff]
        %v225 = vld [vmem:[%s164 + $0xc0] sm:$0xff]
        %v226 = vld [vmem:[%s164 + $0xc8] sm:$0xff]
        %v227 = vld [vmem:[%s164 + $0xd0] sm:$0xff]
        %v228 = vld [vmem:[%s164 + $0xd8] sm:$0xff]
        %v229 = vld [vmem:[%s164 + $0xe0] sm:$0xff]
        %v230 = vld [vmem:[%s164 + $0xe8] sm:$0xff]
        %v231 = vld [vmem:[%s164 + $0xf0] sm:$0xff]
        %v232 = vld [vmem:[%s164 + $0xf8] sm:$0xff]
        %v233 = vld [vmem:[%s164 + $0x100] sm:$0xff]
        %v234 = vld [vmem:[%s164 + $0x108] sm:$0xff]
        %v235 = vld [vmem:[%s164 + $0x110] sm:$0xff]
        %v236 = vld [vmem:[%s164 + $0x118] sm:$0xff]
        %v237 = vld [vmem:[%s164 + $0x120] sm:$0xff]
        %v238 = vld [vmem:[%s164 + $0x128] sm:$0xff]
        %v239 = vld [vmem:[%s164 + $0x130] sm:$0xff]
        %v240 = vld [vmem:[%s164 + $0x138] sm:$0xff]
        %v241 = vld [vmem:[%s164 + $0x140] sm:$0xff]
        %v242 = vld [vmem:[%s164 + $0x148] sm:$0xff]
        %v243 = vld [vmem:[%s164 + $0x150] sm:$0xff]
        %v244 = vld [vmem:[%s164 + $0x158] sm:$0xff]
        %v245 = vld [vmem:[%s164 + $0x160] sm:$0xff]
        %v246 = vld [vmem:[%s164 + $0x168] sm:$0xff]
        %v247 = vld [vmem:[%s164 + $0x170] sm:$0xff]
        %v248 = vld [vmem:[%s164 + $0x178] sm:$0xff]
        %v249 = vld [vmem:[%s164 + $0x180] sm:$0xff]
        %v250 = vld [vmem:[%s164 + $0x188] sm:$0xff]
        %v251 = vld [vmem:[%s164 + $0x190] sm:$0xff]
        %v252 = vld [vmem:[%s164 + $0x198] sm:$0xff]
        %v253 = vld [vmem:[%s164 + $0x1a0] sm:$0xff]
        %v254 = vld [vmem:[%s164 + $0x1a8] sm:$0xff]
        %v255 = vld [vmem:[%s164 + $0x1b0] sm:$0xff]
        %v256 = vld [vmem:[%s164 + $0x1b8] sm:$0xff]
        %v257 = vld [vmem:[%s164 + $0x1c0] sm:$0xff]
        %v258 = vld [vmem:[%s164 + $0x1c8] sm:$0xff]
        %v259 = vld [vmem:[%s164 + $0x1d0] sm:$0xff]
        %v260 = vld [vmem:[%s164 + $0x1d8] sm:$0xff]
        %v261 = vld [vmem:[%s164 + $0x1e0] sm:$0xff]
        %v262 = vld [vmem:[%s164 + $0x1e8] sm:$0xff]
        %v263 = vld [vmem:[%s164 + $0x1f0] sm:$0xff]
        %v264 = vld [vmem:[%s164 + $0x1f8] sm:$0xff]
        %v265 = vld [vmem:[%s164 + $0x200] sm:$0xff]
        %v266 = vld [vmem:[%s164 + $0x208] sm:$0xff]
        %v267 = vld [vmem:[%s164 + $0x210] sm:$0xff]
        %v268 = vld [vmem:[%s164 + $0x218] sm:$0xff]
        %v269 = vld [vmem:[%s164 + $0x220] sm:$0xff]
        %v270 = vld [vmem:[%s164 + $0x228] sm:$0xff]
        %v271 = vld [vmem:[%s164 + $0x230] sm:$0xff]
        %v272 = vld [vmem:[%s164 + $0x238] sm:$0xff]
        %v273 = vld [vmem:[%s164 + $0x240] sm:$0xff]
        %v274 = vld [vmem:[%s164 + $0x248] sm:$0xff]
        %v275 = vld [vmem:[%s164 + $0x250] sm:$0xff]
        %v276 = vld [vmem:[%s164 + $0x258] sm:$0xff]
        %v277 = vld [vmem:[%s164 + $0x260] sm:$0xff]
        %v278 = vld [vmem:[%s164 + $0x268] sm:$0xff]
        %v279 = vld [vmem:[%s164 + $0x270] sm:$0xff]
        %v280 = vld [vmem:[%s164 + $0x278] sm:$0xff]
        %v281 = vld [vmem:[%s164 + $0x280] sm:$0xff]
        %v282 = vld [vmem:[%s164 + $0x288] sm:$0xff]
        %v283 = vld [vmem:[%s164 + $0x290] sm:$0xff]
        %v284 = vld [vmem:[%s164 + $0x298] sm:$0xff]
        %v285 = vld [vmem:[%s164 + $0x2a0] sm:$0xff]
        %v286 = vld [vmem:[%s164 + $0x2a8] sm:$0xff]
        %v287 = vld [vmem:[%s164 + $0x2b0] sm:$0xff]
        %v288 = vld [vmem:[%s164 + $0x2b8] sm:$0xff]
        %v289 = vld [vmem:[%s164 + $0x2c0] sm:$0xff]
        %v290 = vld [vmem:[%s164 + $0x2c8] sm:$0xff]
        %v291 = vld [vmem:[%s164 + $0x2d0] sm:$0xff]
        %v292 = vld [vmem:[%s164 + $0x2d8] sm:$0xff]
        %v293 = vld [vmem:[%s164 + $0x2e0] sm:$0xff]
        %v294 = vld [vmem:[%s164 + $0x2e8] sm:$0xff]
        %v295 = vld [vmem:[%s164 + $0x2f0] sm:$0xff]
        %v296 = vld [vmem:[%s164 + $0x2f8] sm:$0xff]
        %v297 = vld [vmem:[%s164 + $0x300] sm:$0xff]
        %v298 = vld [vmem:[%s164 + $0x308] sm:$0xff]
        %v299 = vld [vmem:[%s164 + $0x310] sm:$0xff]
        %v300 = vld [vmem:[%s164 + $0x318] sm:$0xff]
        %v301 = vld [vmem:[%s164 + $0x320] sm:$0xff]
        %v302 = vld [vmem:[%s164 + $0x328] sm:$0xff]
        %v303 = vld [vmem:[%s164 + $0x330] sm:$0xff]
        %v304 = vld [vmem:[%s164 + $0x338] sm:$0xff]
        %v305 = vld [vmem:[%s164 + $0x340] sm:$0xff]
        %v306 = vld [vmem:[%s164 + $0x348] sm:$0xff]
        %v307 = vld [vmem:[%s164 + $0x350] sm:$0xff]
        %v308 = vld [vmem:[%s164 + $0x358] sm:$0xff]
        %v309 = vld [vmem:[%s164 + $0x360] sm:$0xff]
        %v310 = vld [vmem:[%s164 + $0x368] sm:$0xff]
        %v311 = vld [vmem:[%s164 + $0x370] sm:$0xff]
        %v312 = vld [vmem:[%s164 + $0x378] sm:$0xff]
        %v313 = vld [vmem:[%s164 + $0x380] sm:$0xff]
        %v314 = vld [vmem:[%s164 + $0x388] sm:$0xff]
        %v315 = vld [vmem:[%s164 + $0x390] sm:$0xff]
        %v316 = vld [vmem:[%s164 + $0x398] sm:$0xff]
        %v317 = vld [vmem:[%s164 + $0x3a0] sm:$0xff]
        %v318 = vld [vmem:[%s164 + $0x3a8] sm:$0xff]
        %v319 = vld [vmem:[%s164 + $0x3b0] sm:$0xff]
        %v320 = vld [vmem:[%s164 + $0x3b8] sm:$0xff]
        %v321 = vld [vmem:[%s164 + $0x3c0] sm:$0xff]
        %v322 = vld [vmem:[%s164 + $0x3c8] sm:$0xff]
        %v323 = vld [vmem:[%s164 + $0x3d0] sm:$0xff]
        %v324 = vld [vmem:[%s164 + $0x3d8] sm:$0xff]
        %v325 = vld [vmem:[%s164 + $0x3e0] sm:$0xff]
        %v326 = vld [vmem:[%s164 + $0x3e8] sm:$0xff]
        %v327 = vld [vmem:[%s164 + $0x3f0] sm:$0xff]
        %v328 = vld [vmem:[%s164 + $0x3f8] sm:$0xff]
        %v329 = vld [vmem:[%s164 + $0x400] sm:$0xff]
        %v330 = vld [vmem:[%s164 + $0x408] sm:$0xff]
        %v331 = vld [vmem:[%s164 + $0x410] sm:$0xff]
        %v332 = vld [vmem:[%s164 + $0x418] sm:$0xff]
        %v333 = vld [vmem:[%s164 + $0x420] sm:$0xff]
        %v334 = vld [vmem:[%s164 + $0x428] sm:$0xff]
        %v335 = vld [vmem:[%s164 + $0x430] sm:$0xff]
        %v336 = vld [vmem:[%s164 + $0x438] sm:$0xff]
        %v337 = vld [vmem:[%s164 + $0x440] sm:$0xff]
        %v338 = vld [vmem:[%s164 + $0x448] sm:$0xff]
        %v339 = vld [vmem:[%s164 + $0x450] sm:$0xff]
        %v340 = vld [vmem:[%s164 + $0x458] sm:$0xff]
        %v341 = vld [vmem:[%s164 + $0x460] sm:$0xff]
        %v342 = vld [vmem:[%s164 + $0x468] sm:$0xff]
        %v343 = vld [vmem:[%s164 + $0x470] sm:$0xff]
        %v344 = vld [vmem:[%s164 + $0x478] sm:$0xff]
        %v345 = vld [vmem:[%s164 + $0x480] sm:$0xff]
        %v346 = vld [vmem:[%s164 + $0x488] sm:$0xff]
        %v347 = vld [vmem:[%s164 + $0x490] sm:$0xff]
        %v348 = vld [vmem:[%s164 + $0x498] sm:$0xff]
        %v349 = vld [vmem:[%s164 + $0x4a0] sm:$0xff]
        %v350 = vld [vmem:[%s164 + $0x4a8] sm:$0xff]
        %v351 = vld [vmem:[%s164 + $0x4b0] sm:$0xff]
        %v352 = vld [vmem:[%s164 + $0x4b8] sm:$0xff]
        %v353 = vld [vmem:[%s164 + $0x4c0] sm:$0xff]
        %v354 = vld [vmem:[%s164 + $0x4c8] sm:$0xff]
        %v355 = vld [vmem:[%s164 + $0x4d0] sm:$0xff]
        %v356 = vld [vmem:[%s164 + $0x4d8] sm:$0xff]
        %v357 = vld [vmem:[%s164 + $0x4e0] sm:$0xff]
        %v358 = vld [vmem:[%s164 + $0x4e8] sm:$0xff]
        %v359 = vld [vmem:[%s164 + $0x4f0] sm:$0xff]
        %v360 = vld [vmem:[%s164 + $0x4f8] sm:$0xff]
        %v361 = vld [vmem:[%s164 + $0x500] sm:$0xff]
        %v362 = vld [vmem:[%s164 + $0x508] sm:$0xff]
        %v363 = vld [vmem:[%s164 + $0x510] sm:$0xff]
        %v364 = vld [vmem:[%s164 + $0x518] sm:$0xff]
        %v365 = vld [vmem:[%s164 + $0x520] sm:$0xff]
        %v366 = vld [vmem:[%s164 + $0x528] sm:$0xff]
        %v367 = vld [vmem:[%s164 + $0x530] sm:$0xff]
        %v368 = vld [vmem:[%s164 + $0x538] sm:$0xff]
        %v369 = vld [vmem:[%s164 + $0x540] sm:$0xff]
        %v370 = vld [vmem:[%s164 + $0x548] sm:$0xff]
        %v371 = vld [vmem:[%s164 + $0x550] sm:$0xff]
        %v372 = vld [vmem:[%s164 + $0x558] sm:$0xff]
        %v373 = vld [vmem:[%s164 + $0x560] sm:$0xff]
        %v374 = vld [vmem:[%s164 + $0x568] sm:$0xff]
        %v375 = vld [vmem:[%s164 + $0x570] sm:$0xff]
        %v376 = vld [vmem:[%s164 + $0x578] sm:$0xff]
        %v377 = vld [vmem:[%s164 + $0x580] sm:$0xff]
        %v378 = vld [vmem:[%s164 + $0x588] sm:$0xff]
        %v379 = vld [vmem:[%s164 + $0x590] sm:$0xff]
        %v380 = vld [vmem:[%s164 + $0x598] sm:$0xff]
        %v381 = vld [vmem:[%s164 + $0x5a0] sm:$0xff]
        %v382 = vld [vmem:[%s164 + $0x5a8] sm:$0xff]
        %v383 = vld [vmem:[%s164 + $0x5b0] sm:$0xff]
        %v384 = vld [vmem:[%s164 + $0x5b8] sm:$0xff]
        %v385 = vld [vmem:[%s164 + $0x5c0] sm:$0xff]
        %v386 = vld [vmem:[%s164 + $0x5c8] sm:$0xff]
        %v387 = vld [vmem:[%s164 + $0x5d0] sm:$0xff]
        %v388 = vld [vmem:[%s164 + $0x5d8] sm:$0xff]
        %v389 = vld [vmem:[%s164 + $0x5e0] sm:$0xff]
        %v390 = vld [vmem:[%s164 + $0x5e8] sm:$0xff]
        %v391 = vld [vmem:[%s164 + $0x5f0] sm:$0xff]
        %v392 = vld [vmem:[%s164 + $0x5f8] sm:$0xff]
        %v393 = vld [vmem:[%s164 + $0x600] sm:$0xff]
        %v394 = vld [vmem:[%s164 + $0x608] sm:$0xff]
        %v395 = vld [vmem:[%s164 + $0x610] sm:$0xff]
        %v396 = vld [vmem:[%s164 + $0x618] sm:$0xff]
        %v397 = vld [vmem:[%s164 + $0x620] sm:$0xff]
        %v398 = vld [vmem:[%s164 + $0x628] sm:$0xff]
        %v399 = vld [vmem:[%s164 + $0x630] sm:$0xff]
        %v400 = vld [vmem:[%s164 + $0x638] sm:$0xff]
        %v401 = vld [vmem:[%s164 + $0x640] sm:$0xff]
        %v402 = vld [vmem:[%s164 + $0x648] sm:$0xff]
        %v403 = vld [vmem:[%s164 + $0x650] sm:$0xff]
        %v404 = vld [vmem:[%s164 + $0x658] sm:$0xff]
        %v405 = vld [vmem:[%s164 + $0x660] sm:$0xff]
        %v406 = vld [vmem:[%s164 + $0x668] sm:$0xff]
        %v407 = vld [vmem:[%s164 + $0x670] sm:$0xff]
        %v408 = vld [vmem:[%s164 + $0x678] sm:$0xff]
        %v409 = vld [vmem:[%s164 + $0x680] sm:$0xff]
        %v410 = vld [vmem:[%s164 + $0x688] sm:$0xff]
        %v411 = vld [vmem:[%s164 + $0x690] sm:$0xff]
        %v412 = vld [vmem:[%s164 + $0x698] sm:$0xff]
        %v413 = vld [vmem:[%s164 + $0x6a0] sm:$0xff]
        %v414 = vld [vmem:[%s164 + $0x6a8] sm:$0xff]
        %v415 = vld [vmem:[%s164 + $0x6b0] sm:$0xff]
        %v416 = vld [vmem:[%s164 + $0x6b8] sm:$0xff]
        %v417 = vld [vmem:[%s164 + $0x6c0] sm:$0xff]
        %v418 = vld [vmem:[%s164 + $0x6c8] sm:$0xff]
        %v419 = vld [vmem:[%s164 + $0x6d0] sm:$0xff]
        %v420 = vld [vmem:[%s164 + $0x6d8] sm:$0xff]
        %v421 = vld [vmem:[%s164 + $0x6e0] sm:$0xff]
        %v422 = vld [vmem:[%s164 + $0x6e8] sm:$0xff]
        %v423 = vld [vmem:[%s164 + $0x6f0] sm:$0xff]
        %v424 = vld [vmem:[%s164 + $0x6f8] sm:$0xff]
        %v425 = vld [vmem:[%s164 + $0x700] sm:$0xff]
        %v426 = vld [vmem:[%s164 + $0x708] sm:$0xff]
        %v427 = vld [vmem:[%s164 + $0x710] sm:$0xff]
        %v428 = vld [vmem:[%s164 + $0x718] sm:$0xff]
        %v429 = vld [vmem:[%s164 + $0x720] sm:$0xff]
        %v430 = vld [vmem:[%s164 + $0x728] sm:$0xff]
        %v431 = vld [vmem:[%s164 + $0x730] sm:$0xff]
        %v432 = vld [vmem:[%s164 + $0x738] sm:$0xff]
        %v433 = vld [vmem:[%s164 + $0x740] sm:$0xff]
        %v434 = vld [vmem:[%s164 + $0x748] sm:$0xff]
        %v435 = vld [vmem:[%s164 + $0x750] sm:$0xff]
        %v436 = vld [vmem:[%s164 + $0x758] sm:$0xff]
        %v437 = vld [vmem:[%s164 + $0x760] sm:$0xff]
        %v438 = vld [vmem:[%s164 + $0x768] sm:$0xff]
        %v439 = vld [vmem:[%s164 + $0x770] sm:$0xff]
        %v440 = vld [vmem:[%s164 + $0x778] sm:$0xff]
        %v441 = vld [vmem:[%s164 + $0x780] sm:$0xff]
        %v442 = vld [vmem:[%s164 + $0x788] sm:$0xff]
        %v443 = vld [vmem:[%s164 + $0x790] sm:$0xff]
        %v444 = vld [vmem:[%s164 + $0x798] sm:$0xff]
        %v445 = vld [vmem:[%s164 + $0x7a0] sm:$0xff]
        %v446 = vld [vmem:[%s164 + $0x7a8] sm:$0xff]
        %v447 = vld [vmem:[%s164 + $0x7b0] sm:$0xff]
        %v448 = vld [vmem:[%s164 + $0x7b8] sm:$0xff]
        %v449 = vld [vmem:[%s164 + $0x7c0] sm:$0xff]
        %v450 = vld [vmem:[%s164 + $0x7c8] sm:$0xff]
        %v451 = vld [vmem:[%s164 + $0x7d0] sm:$0xff]
        %v452 = vld [vmem:[%s164 + $0x7d8] sm:$0xff]
        %v453 = vld [vmem:[%s164 + $0x7e0] sm:$0xff]
        %v454 = vld [vmem:[%s164 + $0x7e8] sm:$0xff]
        %v455 = vld [vmem:[%s164 + $0x7f0] sm:$0xff]
        %v456 = vld [vmem:[%s164 + $0x7f8] sm:$0xff]
        %v457 = vld [vmem:[%s164 + $0x800] sm:$0xff]
        %v458 = vld [vmem:[%s164 + $0x808] sm:$0xff]
        %v459 = vld [vmem:[%s164 + $0x810] sm:$0xff]
        %v460 = vld [vmem:[%s164 + $0x818] sm:$0xff]
        %v461 = vld [vmem:[%s164 + $0x820] sm:$0xff]
        %v462 = vld [vmem:[%s164 + $0x828] sm:$0xff]
        %v463 = vld [vmem:[%s164 + $0x830] sm:$0xff]
        %v464 = vld [vmem:[%s164 + $0x838] sm:$0xff]
        %v465 = vld [vmem:[%s164 + $0x840] sm:$0xff]
        %v466 = vld [vmem:[%s164 + $0x848] sm:$0xff]
        %v467 = vld [vmem:[%s164 + $0x850] sm:$0xff]
        %v468 = vld [vmem:[%s164 + $0x858] sm:$0xff]
        %v469 = vld [vmem:[%s164 + $0x860] sm:$0xff]
        %v470 = vld [vmem:[%s164 + $0x868] sm:$0xff]
        %v471 = vld [vmem:[%s164 + $0x870] sm:$0xff]
        %v472 = vld [vmem:[%s164 + $0x878] sm:$0xff]
        %v473 = vld [vmem:[%s164 + $0x880] sm:$0xff]
        %v474 = vld [vmem:[%s164 + $0x888] sm:$0xff]
        %v475 = vld [vmem:[%s164 + $0x890] sm:$0xff]
        %v476 = vld [vmem:[%s164 + $0x898] sm:$0xff]
        %v477 = vld [vmem:[%s164 + $0x8a0] sm:$0xff]
        %v478 = vld [vmem:[%s164 + $0x8a8] sm:$0xff]
        %v479 = vld [vmem:[%s164 + $0x8b0] sm:$0xff]
        %v480 = vld [vmem:[%s164 + $0x8b8] sm:$0xff]
        %v481 = vld [vmem:[%s164 + $0x8c0] sm:$0xff]
        %v482 = vld [vmem:[%s164 + $0x8c8] sm:$0xff]
        %v483 = vld [vmem:[%s164 + $0x8d0] sm:$0xff]
        %v484 = vld [vmem:[%s164 + $0x8d8] sm:$0xff]
        %v485 = vld [vmem:[%s164 + $0x8e0] sm:$0xff]
        %v486 = vld [vmem:[%s164 + $0x8e8] sm:$0xff]
        %v487 = vld [vmem:[%s164 + $0x8f0] sm:$0xff]
        %v488 = vld [vmem:[%s164 + $0x8f8] sm:$0xff]
        %v489 = vld [vmem:[%s164 + $0x900] sm:$0xff]
        %v490 = vld [vmem:[%s164 + $0x908] sm:$0xff]
        %v491 = vld [vmem:[%s164 + $0x910] sm:$0xff]
        %v492 = vld [vmem:[%s164 + $0x918] sm:$0xff]
        %v493 = vld [vmem:[%s164 + $0x920] sm:$0xff]
        %v494 = vld [vmem:[%s164 + $0x928] sm:$0xff]
        %v495 = vld [vmem:[%s164 + $0x930] sm:$0xff]
        %v496 = vld [vmem:[%s164 + $0x938] sm:$0xff]
        %v497 = vld [vmem:[%s164 + $0x940] sm:$0xff]
        %v498 = vld [vmem:[%s164 + $0x948] sm:$0xff]
        %v499 = vld [vmem:[%s164 + $0x950] sm:$0xff]
        %v500 = vld [vmem:[%s164 + $0x958] sm:$0xff]
        %v501 = vld [vmem:[%s164 + $0x960] sm:$0xff]
        %v502 = vld [vmem:[%s164 + $0x968] sm:$0xff]
        %v503 = vld [vmem:[%s164 + $0x970] sm:$0xff]
        %v504 = vld [vmem:[%s164 + $0x978] sm:$0xff]
        %v505 = vld [vmem:[%s164 + $0x980] sm:$0xff]
        %v506 = vld [vmem:[%s164 + $0x988] sm:$0xff]
        %v507 = vld [vmem:[%s164 + $0x990] sm:$0xff]
        %v508 = vld [vmem:[%s164 + $0x998] sm:$0xff]
        %v509 = vld [vmem:[%s164 + $0x9a0] sm:$0xff]
        %v510 = vld [vmem:[%s164 + $0x9a8] sm:$0xff]
        %v511 = vld [vmem:[%s164 + $0x9b0] sm:$0xff]
        %v512 = vld [vmem:[%s164 + $0x9b8] sm:$0xff]
        %v513 = vld [vmem:[%s164 + $0x9c0] sm:$0xff]
        %v514 = vld [vmem:[%s164 + $0x9c8] sm:$0xff]
        %v515 = vld [vmem:[%s164 + $0x9d0] sm:$0xff]
        %v516 = vld [vmem:[%s164 + $0x9d8] sm:$0xff]
        %v517 = vld [vmem:[%s164 + $0x9e0] sm:$0xff]
        %v518 = vld [vmem:[%s164 + $0x9e8] sm:$0xff]
        %v519 = vld [vmem:[%s164 + $0x9f0] sm:$0xff]
        %v520 = vld [vmem:[%s164 + $0x9f8] sm:$0xff]
        %v521 = vld [vmem:[%s164 + $0xa00] sm:$0xff]
        %v522 = vld [vmem:[%s164 + $0xa08] sm:$0xff]
        %v523 = vld [vmem:[%s164 + $0xa10] sm:$0xff]
        %v524 = vld [vmem:[%s164 + $0xa18] sm:$0xff]
        %v525 = vld [vmem:[%s164 + $0xa20] sm:$0xff]
        %v526 = vld [vmem:[%s164 + $0xa28] sm:$0xff]
        %v527 = vld [vmem:[%s164 + $0xa30] sm:$0xff]
        %v528 = vld [vmem:[%s164 + $0xa38] sm:$0xff]
        %v529 = vld [vmem:[%s164 + $0xa40] sm:$0xff]
        %v530 = vld [vmem:[%s164 + $0xa48] sm:$0xff]
        %v531 = vld [vmem:[%s164 + $0xa50] sm:$0xff]
        %v532 = vld [vmem:[%s164 + $0xa58] sm:$0xff]
        %v533 = vld [vmem:[%s164 + $0xa60] sm:$0xff]
        %v534 = vld [vmem:[%s164 + $0xa68] sm:$0xff]
        %v535 = vld [vmem:[%s164 + $0xa70] sm:$0xff]
        %v536 = vld [vmem:[%s164 + $0xa78] sm:$0xff]
        %v537 = vld [vmem:[%s164 + $0xa80] sm:$0xff]
        %v538 = vld [vmem:[%s164 + $0xa88] sm:$0xff]
        %v539 = vld [vmem:[%s164 + $0xa90] sm:$0xff]
        %v540 = vld [vmem:[%s164 + $0xa98] sm:$0xff]
        %v541 = vld [vmem:[%s164 + $0xaa0] sm:$0xff]
        %v542 = vld [vmem:[%s164 + $0xaa8] sm:$0xff]
        %v543 = vld [vmem:[%s164 + $0xab0] sm:$0xff]
        %v544 = vld [vmem:[%s164 + $0xab8] sm:$0xff]
        %v545 = vld [vmem:[%s164 + $0xac0] sm:$0xff]
        %v546 = vld [vmem:[%s164 + $0xac8] sm:$0xff]
        %v547 = vld [vmem:[%s164 + $0xad0] sm:$0xff]
        %v548 = vld [vmem:[%s164 + $0xad8] sm:$0xff]
        %v549 = vld [vmem:[%s164 + $0xae0] sm:$0xff]
        %v550 = vld [vmem:[%s164 + $0xae8] sm:$0xff]
        %v551 = vld [vmem:[%s164 + $0xaf0] sm:$0xff]
        %v552 = vld [vmem:[%s164 + $0xaf8] sm:$0xff]
        %v553 = vld [vmem:[%s164 + $0xb00] sm:$0xff]
        %v554 = vld [vmem:[%s164 + $0xb08] sm:$0xff]
        %v555 = vld [vmem:[%s164 + $0xb10] sm:$0xff]
        %v556 = vld [vmem:[%s164 + $0xb18] sm:$0xff]
        %v557 = vld [vmem:[%s164 + $0xb20] sm:$0xff]
        %v558 = vld [vmem:[%s164 + $0xb28] sm:$0xff]
        %v559 = vld [vmem:[%s164 + $0xb30] sm:$0xff]
        %v560 = vld [vmem:[%s164 + $0xb38] sm:$0xff]
        %v561 = vld [vmem:[%s164 + $0xb40] sm:$0xff]
        %v562 = vld [vmem:[%s164 + $0xb48] sm:$0xff]
        %v563 = vld [vmem:[%s164 + $0xb50] sm:$0xff]
        %v564 = vld [vmem:[%s164 + $0xb58] sm:$0xff]
        %v565 = vld [vmem:[%s164 + $0xb60] sm:$0xff]
        %v566 = vld [vmem:[%s164 + $0xb68] sm:$0xff]
        %v567 = vld [vmem:[%s164 + $0xb70] sm:$0xff]
        %v568 = vld [vmem:[%s164 + $0xb78] sm:$0xff]
        %v569 = vld [vmem:[%s164 + $0xb80] sm:$0xff]
        %v570 = vld [vmem:[%s164 + $0xb88] sm:$0xff]
        %v571 = vld [vmem:[%s164 + $0xb90] sm:$0xff]
        %v572 = vld [vmem:[%s164 + $0xb98] sm:$0xff]
        %v573 = vld [vmem:[%s164 + $0xba0] sm:$0xff]
        %v574 = vld [vmem:[%s164 + $0xba8] sm:$0xff]
        %v575 = vld [vmem:[%s164 + $0xbb0] sm:$0xff]
        %v576 = vld [vmem:[%s164 + $0xbb8] sm:$0xff]
        %v577 = vld [vmem:[%s164 + $0xbc0] sm:$0xff]
        %v578 = vld [vmem:[%s164 + $0xbc8] sm:$0xff]
        %v579 = vld [vmem:[%s164 + $0xbd0] sm:$0xff]
        %v580 = vld [vmem:[%s164 + $0xbd8] sm:$0xff]
        %v581 = vld [vmem:[%s164 + $0xbe0] sm:$0xff]
        %v582 = vld [vmem:[%s164 + $0xbe8] sm:$0xff]
        %v583 = vld [vmem:[%s164 + $0xbf0] sm:$0xff]
        %v584 = vld [vmem:[%s164 + $0xbf8] sm:$0xff]
        %v585 = vld [vmem:[%s164 + $0xc00] sm:$0xff]
        %v586 = vld [vmem:[%s164 + $0xc08] sm:$0xff]
        %v587 = vld [vmem:[%s164 + $0xc10] sm:$0xff]
        %v588 = vld [vmem:[%s164 + $0xc18] sm:$0xff]
        %v589 = vld [vmem:[%s164 + $0xc20] sm:$0xff]
        %v590 = vld [vmem:[%s164 + $0xc28] sm:$0xff]
        %v591 = vld [vmem:[%s164 + $0xc30] sm:$0xff]
        %v592 = vld [vmem:[%s164 + $0xc38] sm:$0xff]
        %v593 = vld [vmem:[%s164 + $0xc40] sm:$0xff]
        %v594 = vld [vmem:[%s164 + $0xc48] sm:$0xff]
        %v595 = vld [vmem:[%s164 + $0xc50] sm:$0xff]
        %v596 = vld [vmem:[%s164 + $0xc58] sm:$0xff]
        %v597 = vld [vmem:[%s164 + $0xc60] sm:$0xff]
        %v598 = vld [vmem:[%s164 + $0xc68] sm:$0xff]
        %v599 = vld [vmem:[%s164 + $0xc70] sm:$0xff]
        %v600 = vld [vmem:[%s164 + $0xc78] sm:$0xff]
        %v601 = vld [vmem:[%s164 + $0xc80] sm:$0xff]
        %v602 = vld [vmem:[%s164 + $0xc88] sm:$0xff]
        %v603 = vld [vmem:[%s164 + $0xc90] sm:$0xff]
        %v604 = vld [vmem:[%s164 + $0xc98] sm:$0xff]
        %v605 = vld [vmem:[%s164 + $0xca0] sm:$0xff]
        %v606 = vld [vmem:[%s164 + $0xca8] sm:$0xff]
        %v607 = vld [vmem:[%s164 + $0xcb0] sm:$0xff]
        %v608 = vld [vmem:[%s164 + $0xcb8] sm:$0xff]
        %v609 = vld [vmem:[%s164 + $0xcc0] sm:$0xff]
        %v610 = vld [vmem:[%s164 + $0xcc8] sm:$0xff]
        %v611 = vld [vmem:[%s164 + $0xcd0] sm:$0xff]
        %v612 = vld [vmem:[%s164 + $0xcd8] sm:$0xff]
        %v613 = vld [vmem:[%s164 + $0xce0] sm:$0xff]
        %v614 = vld [vmem:[%s164 + $0xce8] sm:$0xff]
        %v615 = vld [vmem:[%s164 + $0xcf0] sm:$0xff]
        %v616 = vld [vmem:[%s164 + $0xcf8] sm:$0xff]
        %v617 = vld [vmem:[%s164 + $0xd00] sm:$0xff]
        %v618 = vld [vmem:[%s164 + $0xd08] sm:$0xff]
        %v619 = vld [vmem:[%s164 + $0xd10] sm:$0xff]
        %v620 = vld [vmem:[%s164 + $0xd18] sm:$0xff]
        %v621 = vld [vmem:[%s164 + $0xd20] sm:$0xff]
        %v622 = vld [vmem:[%s164 + $0xd28] sm:$0xff]
        %v623 = vld [vmem:[%s164 + $0xd30] sm:$0xff]
        %v624 = vld [vmem:[%s164 + $0xd38] sm:$0xff]
        %v625 = vld [vmem:[%s164 + $0xd40] sm:$0xff]
        %v626 = vld [vmem:[%s164 + $0xd48] sm:$0xff]
        %v627 = vld [vmem:[%s164 + $0xd50] sm:$0xff]
        %v628 = vld [vmem:[%s164 + $0xd58] sm:$0xff]
        %v629 = vld [vmem:[%s164 + $0xd60] sm:$0xff]
        %v630 = vld [vmem:[%s164 + $0xd68] sm:$0xff]
        %v631 = vld [vmem:[%s164 + $0xd70] sm:$0xff]
        %v632 = vld [vmem:[%s164 + $0xd78] sm:$0xff]
        %v633 = vld [vmem:[%s164 + $0xd80] sm:$0xff]
        %v634 = vld [vmem:[%s164 + $0xd88] sm:$0xff]
        %v635 = vld [vmem:[%s164 + $0xd90] sm:$0xff]
        %v636 = vld [vmem:[%s164 + $0xd98] sm:$0xff]
        %v637 = vld [vmem:[%s164 + $0xda0] sm:$0xff]
        %v638 = vld [vmem:[%s164 + $0xda8] sm:$0xff]
        %v639 = vld [vmem:[%s164 + $0xdb0] sm:$0xff]
        %v640 = vld [vmem:[%s164 + $0xdb8] sm:$0xff]
        %v641 = vld [vmem:[%s164 + $0xdc0] sm:$0xff]
        %v642 = vld [vmem:[%s164 + $0xdc8] sm:$0xff]
        %v643 = vld [vmem:[%s164 + $0xdd0] sm:$0xff]
        %v644 = vld [vmem:[%s164 + $0xdd8] sm:$0xff]
        %v645 = vld [vmem:[%s164 + $0xde0] sm:$0xff]
        %v646 = vld [vmem:[%s164 + $0xde8] sm:$0xff]
        %v647 = vld [vmem:[%s164 + $0xdf0] sm:$0xff]
        %v648 = vld [vmem:[%s164 + $0xdf8] sm:$0xff]
        %v649 = vld [vmem:[%s164 + $0xe00] sm:$0xff]
        %v650 = vld [vmem:[%s164 + $0xe08] sm:$0xff]
        %v651 = vld [vmem:[%s164 + $0xe10] sm:$0xff]
        %v652 = vld [vmem:[%s164 + $0xe18] sm:$0xff]
        %v653 = vld [vmem:[%s164 + $0xe20] sm:$0xff]
        %v654 = vld [vmem:[%s164 + $0xe28] sm:$0xff]
        %v655 = vld [vmem:[%s164 + $0xe30] sm:$0xff]
        %v656 = vld [vmem:[%s164 + $0xe38] sm:$0xff]
        %v657 = vld [vmem:[%s164 + $0xe40] sm:$0xff]
        %v658 = vld [vmem:[%s164 + $0xe48] sm:$0xff]
        %v659 = vld [vmem:[%s164 + $0xe50] sm:$0xff]
        %v660 = vld [vmem:[%s164 + $0xe58] sm:$0xff]
        %v661 = vld [vmem:[%s164 + $0xe60] sm:$0xff]
        %v662 = vld [vmem:[%s164 + $0xe68] sm:$0xff]
        %v663 = vld [vmem:[%s164 + $0xe70] sm:$0xff]
        %v664 = vld [vmem:[%s164 + $0xe78] sm:$0xff]
        %v665 = vld [vmem:[%s164 + $0xe80] sm:$0xff]
        %v666 = vld [vmem:[%s164 + $0xe88] sm:$0xff]
        %v667 = vld [vmem:[%s164 + $0xe90] sm:$0xff]
        %v668 = vld [vmem:[%s164 + $0xe98] sm:$0xff]
        %v669 = vld [vmem:[%s164 + $0xea0] sm:$0xff]
        %v670 = vld [vmem:[%s164 + $0xea8] sm:$0xff]
        %v671 = vld [vmem:[%s164 + $0xeb0] sm:$0xff]
        %v672 = vld [vmem:[%s164 + $0xeb8] sm:$0xff]
        %v673 = vld [vmem:[%s164 + $0xec0] sm:$0xff]
        %v674 = vld [vmem:[%s164 + $0xec8] sm:$0xff]
        %v675 = vld [vmem:[%s164 + $0xed0] sm:$0xff]
        %v676 = vld [vmem:[%s164 + $0xed8] sm:$0xff]
        %v677 = vld [vmem:[%s164 + $0xee0] sm:$0xff]
        %v678 = vld [vmem:[%s164 + $0xee8] sm:$0xff]
        %v679 = vld [vmem:[%s164 + $0xef0] sm:$0xff]
        %v680 = vld [vmem:[%s164 + $0xef8] sm:$0xff]
        %v681 = vld [vmem:[%s164 + $0xf00] sm:$0xff]
        %v682 = vld [vmem:[%s164 + $0xf08] sm:$0xff]
        %v683 = vld [vmem:[%s164 + $0xf10] sm:$0xff]
        %v684 = vld [vmem:[%s164 + $0xf18] sm:$0xff]
        %v685 = vld [vmem:[%s164 + $0xf20] sm:$0xff]
        %v686 = vld [vmem:[%s164 + $0xf28] sm:$0xff]
        %v687 = vld [vmem:[%s164 + $0xf30] sm:$0xff]
        %v688 = vld [vmem:[%s164 + $0xf38] sm:$0xff]
        %v689 = vld [vmem:[%s164 + $0xf40] sm:$0xff]
        %v690 = vld [vmem:[%s164 + $0xf48] sm:$0xff]
        %v691 = vld [vmem:[%s164 + $0xf50] sm:$0xff]
        %v692 = vld [vmem:[%s164 + $0xf58] sm:$0xff]
        %v693 = vld [vmem:[%s164 + $0xf60] sm:$0xff]
        %v694 = vld [vmem:[%s164 + $0xf68] sm:$0xff]
        %v695 = vld [vmem:[%s164 + $0xf70] sm:$0xff]
        %v696 = vld [vmem:[%s164 + $0xf78] sm:$0xff]
        %v697 = vld [vmem:[%s164 + $0xf80] sm:$0xff]
        %v698 = vld [vmem:[%s164 + $0xf88] sm:$0xff]
        %v699 = vld [vmem:[%s164 + $0xf90] sm:$0xff]
        %v700 = vld [vmem:[%s164 + $0xf98] sm:$0xff]
        %v701 = vld [vmem:[%s164 + $0xfa0] sm:$0xff]
        %v702 = vld [vmem:[%s164 + $0xfa8] sm:$0xff]
        %v703 = vld [vmem:[%s164 + $0xfb0] sm:$0xff]
        %v704 = vld [vmem:[%s164 + $0xfb8] sm:$0xff]
        %v705 = vld [vmem:[%s164 + $0xfc0] sm:$0xff]
        %v706 = vld [vmem:[%s164 + $0xfc8] sm:$0xff]
        %v707 = vld [vmem:[%s164 + $0xfd0] sm:$0xff]
        %v708 = vld [vmem:[%s164 + $0xfd8] sm:$0xff]
        %v709 = vld [vmem:[%s164 + $0xfe0] sm:$0xff]
        %v710 = vld [vmem:[%s164 + $0xfe8] sm:$0xff]
        %v711 = vld [vmem:[%s164 + $0xff0] sm:$0xff]
        %v712 = vld [vmem:[%s164 + $0xff8] sm:$0xff]
        %v713 = vstv %s199
        %v714 = vmax.f32 %v713, %v201
        %v715 = vmax.f32 %v713, %v202
        %v716 = vmax.f32 %v713, %v203
        %v717 = vmax.f32 %v713, %v204
        %v718 = vmax.f32 %v713, %v205
        %v719 = vmax.f32 %v713, %v206
        %v720 = vmax.f32 %v713, %v207
        %v721 = vmax.f32 %v713, %v208
        %v722 = vmax.f32 %v713, %v209
        %v723 = vmax.f32 %v713, %v210
        %v724 = vmax.f32 %v713, %v211
        %v725 = vmax.f32 %v713, %v212
        %v726 = vmax.f32 %v713, %v213
        %v727 = vmax.f32 %v713, %v214
        %v728 = vmax.f32 %v713, %v215
        %v729 = vmax.f32 %v713, %v216
        %v730 = vmax.f32 %v713, %v217
        %v731 = vmax.f32 %v713, %v218
        %v732 = vmax.f32 %v713, %v219
        %v733 = vmax.f32 %v713, %v220
        %v734 = vmax.f32 %v713, %v221
        %v735 = vmax.f32 %v713, %v222
        %v736 = vmax.f32 %v713, %v223
        %v737 = vmax.f32 %v713, %v224
        %v738 = vmax.f32 %v713, %v225
        %v739 = vmax.f32 %v713, %v226
        %v740 = vmax.f32 %v713, %v227
        %v741 = vmax.f32 %v713, %v228
        %v742 = vmax.f32 %v713, %v229
        %v743 = vmax.f32 %v713, %v230
        %v744 = vmax.f32 %v713, %v231
        %v745 = vmax.f32 %v713, %v232
        %v746 = vmax.f32 %v713, %v233
        %v747 = vmax.f32 %v713, %v234
        %v748 = vmax.f32 %v713, %v235
        %v749 = vmax.f32 %v713, %v236
        %v750 = vmax.f32 %v713, %v237
        %v751 = vmax.f32 %v713, %v238
        %v752 = vmax.f32 %v713, %v239
        %v753 = vmax.f32 %v713, %v240
        %v754 = vmax.f32 %v713, %v241
        %v755 = vmax.f32 %v713, %v242
        %v756 = vmax.f32 %v713, %v243
        %v757 = vmax.f32 %v713, %v244
        %v758 = vmax.f32 %v713, %v245
        %v759 = vmax.f32 %v713, %v246
        %v760 = vmax.f32 %v713, %v247
        %v761 = vmax.f32 %v713, %v248
        %v762 = vmax.f32 %v713, %v249
        %v763 = vmax.f32 %v713, %v250
        %v764 = vmax.f32 %v713, %v251
        %v765 = vmax.f32 %v713, %v252
        %v766 = vmax.f32 %v713, %v253
        %v767 = vmax.f32 %v713, %v254
        %v768 = vmax.f32 %v713, %v255
        %v769 = vmax.f32 %v713, %v256
        %v770 = vmax.f32 %v713, %v257
        %v771 = vmax.f32 %v713, %v258
        %v772 = vmax.f32 %v713, %v259
        %v773 = vmax.f32 %v713, %v260
        %v774 = vmax.f32 %v713, %v261
        %v775 = vmax.f32 %v713, %v262
        %v776 = vmax.f32 %v713, %v263
        %v777 = vmax.f32 %v713, %v264
        %v778 = vmax.f32 %v713, %v265
        %v779 = vmax.f32 %v713, %v266
        %v780 = vmax.f32 %v713, %v267
        %v781 = vmax.f32 %v713, %v268
        %v782 = vmax.f32 %v713, %v269
        %v783 = vmax.f32 %v713, %v270
        %v784 = vmax.f32 %v713, %v271
        %v785 = vmax.f32 %v713, %v272
        %v786 = vmax.f32 %v713, %v273
        %v787 = vmax.f32 %v713, %v274
        %v788 = vmax.f32 %v713, %v275
        %v789 = vmax.f32 %v713, %v276
        %v790 = vmax.f32 %v713, %v277
        %v791 = vmax.f32 %v713, %v278
        %v792 = vmax.f32 %v713, %v279
        %v793 = vmax.f32 %v713, %v280
        %v794 = vmax.f32 %v713, %v281
        %v795 = vmax.f32 %v713, %v282
        %v796 = vmax.f32 %v713, %v283
        %v797 = vmax.f32 %v713, %v284
        %v798 = vmax.f32 %v713, %v285
        %v799 = vmax.f32 %v713, %v286
        %v800 = vmax.f32 %v713, %v287
        %v801 = vmax.f32 %v713, %v288
        %v802 = vmax.f32 %v713, %v289
        %v803 = vmax.f32 %v713, %v290
        %v804 = vmax.f32 %v713, %v291
        %v805 = vmax.f32 %v713, %v292
        %v806 = vmax.f32 %v713, %v293
        %v807 = vmax.f32 %v713, %v294
        %v808 = vmax.f32 %v713, %v295
        %v809 = vmax.f32 %v713, %v296
        %v810 = vmax.f32 %v713, %v297
        %v811 = vmax.f32 %v713, %v298
        %v812 = vmax.f32 %v713, %v299
        %v813 = vmax.f32 %v713, %v300
        %v814 = vmax.f32 %v713, %v301
        %v815 = vmax.f32 %v713, %v302
        %v816 = vmax.f32 %v713, %v303
        %v817 = vmax.f32 %v713, %v304
        %v818 = vmax.f32 %v713, %v305
        %v819 = vmax.f32 %v713, %v306
        %v820 = vmax.f32 %v713, %v307
        %v821 = vmax.f32 %v713, %v308
        %v822 = vmax.f32 %v713, %v309
        %v823 = vmax.f32 %v713, %v310
        %v824 = vmax.f32 %v713, %v311
        %v825 = vmax.f32 %v713, %v312
        %v826 = vmax.f32 %v713, %v313
        %v827 = vmax.f32 %v713, %v314
        %v828 = vmax.f32 %v713, %v315
        %v829 = vmax.f32 %v713, %v316
        %v830 = vmax.f32 %v713, %v317
        %v831 = vmax.f32 %v713, %v318
        %v832 = vmax.f32 %v713, %v319
        %v833 = vmax.f32 %v713, %v320
        %v834 = vmax.f32 %v713, %v321
        %v835 = vmax.f32 %v713, %v322
        %v836 = vmax.f32 %v713, %v323
        %v837 = vmax.f32 %v713, %v324
        %v838 = vmax.f32 %v713, %v325
        %v839 = vmax.f32 %v713, %v326
        %v840 = vmax.f32 %v713, %v327
        %v841 = vmax.f32 %v713, %v328
        %v842 = vmax.f32 %v713, %v329
        %v843 = vmax.f32 %v713, %v330
        %v844 = vmax.f32 %v713, %v331
        %v845 = vmax.f32 %v713, %v332
        %v846 = vmax.f32 %v713, %v333
        %v847 = vmax.f32 %v713, %v334
        %v848 = vmax.f32 %v713, %v335
        %v849 = vmax.f32 %v713, %v336
        %v850 = vmax.f32 %v713, %v337
        %v851 = vmax.f32 %v713, %v338
        %v852 = vmax.f32 %v713, %v339
        %v853 = vmax.f32 %v713, %v340
        %v854 = vmax.f32 %v713, %v341
        %v855 = vmax.f32 %v713, %v342
        %v856 = vmax.f32 %v713, %v343
        %v857 = vmax.f32 %v713, %v344
        %v858 = vmax.f32 %v713, %v345
        %v859 = vmax.f32 %v713, %v346
        %v860 = vmax.f32 %v713, %v347
        %v861 = vmax.f32 %v713, %v348
        %v862 = vmax.f32 %v713, %v349
        %v863 = vmax.f32 %v713, %v350
        %v864 = vmax.f32 %v713, %v351
        %v865 = vmax.f32 %v713, %v352
        %v866 = vmax.f32 %v713, %v353
        %v867 = vmax.f32 %v713, %v354
        %v868 = vmax.f32 %v713, %v355
        %v869 = vmax.f32 %v713, %v356
        %v870 = vmax.f32 %v713, %v357
        %v871 = vmax.f32 %v713, %v358
        %v872 = vmax.f32 %v713, %v359
        %v873 = vmax.f32 %v713, %v360
        %v874 = vmax.f32 %v713, %v361
        %v875 = vmax.f32 %v713, %v362
        %v876 = vmax.f32 %v713, %v363
        %v877 = vmax.f32 %v713, %v364
        %v878 = vmax.f32 %v713, %v365
        %v879 = vmax.f32 %v713, %v366
        %v880 = vmax.f32 %v713, %v367
        %v881 = vmax.f32 %v713, %v368
        %v882 = vmax.f32 %v713, %v369
        %v883 = vmax.f32 %v713, %v370
        %v884 = vmax.f32 %v713, %v371
        %v885 = vmax.f32 %v713, %v372
        %v886 = vmax.f32 %v713, %v373
        %v887 = vmax.f32 %v713, %v374
        %v888 = vmax.f32 %v713, %v375
        %v889 = vmax.f32 %v713, %v376
        %v890 = vmax.f32 %v713, %v377
        %v891 = vmax.f32 %v713, %v378
        %v892 = vmax.f32 %v713, %v379
        %v893 = vmax.f32 %v713, %v380
        %v894 = vmax.f32 %v713, %v381
        %v895 = vmax.f32 %v713, %v382
        %v896 = vmax.f32 %v713, %v383
        %v897 = vmax.f32 %v713, %v384
        %v898 = vmax.f32 %v713, %v385
        %v899 = vmax.f32 %v713, %v386
        %v900 = vmax.f32 %v713, %v387
        %v901 = vmax.f32 %v713, %v388
        %v902 = vmax.f32 %v713, %v389
        %v903 = vmax.f32 %v713, %v390
        %v904 = vmax.f32 %v713, %v391
        %v905 = vmax.f32 %v713, %v392
        %v906 = vmax.f32 %v713, %v393
        %v907 = vmax.f32 %v713, %v394
        %v908 = vmax.f32 %v713, %v395
        %v909 = vmax.f32 %v713, %v396
        %v910 = vmax.f32 %v713, %v397
        %v911 = vmax.f32 %v713, %v398
        %v912 = vmax.f32 %v713, %v399
        %v913 = vmax.f32 %v713, %v400
        %v914 = vmax.f32 %v713, %v401
        %v915 = vmax.f32 %v713, %v402
        %v916 = vmax.f32 %v713, %v403
        %v917 = vmax.f32 %v713, %v404
        %v918 = vmax.f32 %v713, %v405
        %v919 = vmax.f32 %v713, %v406
        %v920 = vmax.f32 %v713, %v407
        %v921 = vmax.f32 %v713, %v408
        %v922 = vmax.f32 %v713, %v409
        %v923 = vmax.f32 %v713, %v410
        %v924 = vmax.f32 %v713, %v411
        %v925 = vmax.f32 %v713, %v412
        %v926 = vmax.f32 %v713, %v413
        %v927 = vmax.f32 %v713, %v414
        %v928 = vmax.f32 %v713, %v415
        %v929 = vmax.f32 %v713, %v416
        %v930 = vmax.f32 %v713, %v417
        %v931 = vmax.f32 %v713, %v418
        %v932 = vmax.f32 %v713, %v419
        %v933 = vmax.f32 %v713, %v420
        %v934 = vmax.f32 %v713, %v421
        %v935 = vmax.f32 %v713, %v422
        %v936 = vmax.f32 %v713, %v423
        %v937 = vmax.f32 %v713, %v424
        %v938 = vmax.f32 %v713, %v425
        %v939 = vmax.f32 %v713, %v426
        %v940 = vmax.f32 %v713, %v427
        %v941 = vmax.f32 %v713, %v428
        %v942 = vmax.f32 %v713, %v429
        %v943 = vmax.f32 %v713, %v430
        %v944 = vmax.f32 %v713, %v431
        %v945 = vmax.f32 %v713, %v432
        %v946 = vmax.f32 %v713, %v433
        %v947 = vmax.f32 %v713, %v434
        %v948 = vmax.f32 %v713, %v435
        %v949 = vmax.f32 %v713, %v436
        %v950 = vmax.f32 %v713, %v437
        %v951 = vmax.f32 %v713, %v438
        %v952 = vmax.f32 %v713, %v439
        %v953 = vmax.f32 %v713, %v440
        %v954 = vmax.f32 %v713, %v441
        %v955 = vmax.f32 %v713, %v442
        %v956 = vmax.f32 %v713, %v443
        %v957 = vmax.f32 %v713, %v444
        %v958 = vmax.f32 %v713, %v445
        %v959 = vmax.f32 %v713, %v446
        %v960 = vmax.f32 %v713, %v447
        %v961 = vmax.f32 %v713, %v448
        %v962 = vmax.f32 %v713, %v449
        %v963 = vmax.f32 %v713, %v450
        %v964 = vmax.f32 %v713, %v451
        %v965 = vmax.f32 %v713, %v452
        %v966 = vmax.f32 %v713, %v453
        %v967 = vmax.f32 %v713, %v454
        %v968 = vmax.f32 %v713, %v455
        %v969 = vmax.f32 %v713, %v456
        %v970 = vmax.f32 %v713, %v457
        %v971 = vmax.f32 %v713, %v458
        %v972 = vmax.f32 %v713, %v459
        %v973 = vmax.f32 %v713, %v460
        %v974 = vmax.f32 %v713, %v461
        %v975 = vmax.f32 %v713, %v462
        %v976 = vmax.f32 %v713, %v463
        %v977 = vmax.f32 %v713, %v464
        %v978 = vmax.f32 %v713, %v465
        %v979 = vmax.f32 %v713, %v466
        %v980 = vmax.f32 %v713, %v467
        %v981 = vmax.f32 %v713, %v468
        %v982 = vmax.f32 %v713, %v469
        %v983 = vmax.f32 %v713, %v470
        %v984 = vmax.f32 %v713, %v471
        %v985 = vmax.f32 %v713, %v472
        %v986 = vmax.f32 %v713, %v473
        %v987 = vmax.f32 %v713, %v474
        %v988 = vmax.f32 %v713, %v475
        %v989 = vmax.f32 %v713, %v476
        %v990 = vmax.f32 %v713, %v477
        %v991 = vmax.f32 %v713, %v478
        %v992 = vmax.f32 %v713, %v479
        %v993 = vmax.f32 %v713, %v480
        %v994 = vmax.f32 %v713, %v481
        %v995 = vmax.f32 %v713, %v482
        %v996 = vmax.f32 %v713, %v483
        %v997 = vmax.f32 %v713, %v484
        %v998 = vmax.f32 %v713, %v485
        %v999 = vmax.f32 %v713, %v486
        %v1000 = vmax.f32 %v713, %v487
        %v1001 = vmax.f32 %v713, %v488
        %v1002 = vmax.f32 %v713, %v489
        %v1003 = vmax.f32 %v713, %v490
        %v1004 = vmax.f32 %v713, %v491
        %v1005 = vmax.f32 %v713, %v492
        %v1006 = vmax.f32 %v713, %v493
        %v1007 = vmax.f32 %v713, %v494
        %v1008 = vmax.f32 %v713, %v495
        %v1009 = vmax.f32 %v713, %v496
        %v1010 = vmax.f32 %v713, %v497
        %v1011 = vmax.f32 %v713, %v498
        %v1012 = vmax.f32 %v713, %v499
        %v1013 = vmax.f32 %v713, %v500
        %v1014 = vmax.f32 %v713, %v501
        %v1015 = vmax.f32 %v713, %v502
        %v1016 = vmax.f32 %v713, %v503
        %v1017 = vmax.f32 %v713, %v504
        %v1018 = vmax.f32 %v713, %v505
        %v1019 = vmax.f32 %v713, %v506
        %v1020 = vmax.f32 %v713, %v507
        %v1021 = vmax.f32 %v713, %v508
        %v1022 = vmax.f32 %v713, %v509
        %v1023 = vmax.f32 %v713, %v510
        %v1024 = vmax.f32 %v713, %v511
        %v1025 = vmax.f32 %v713, %v512
        %v1026 = vmax.f32 %v713, %v513
        %v1027 = vmax.f32 %v713, %v514
        %v1028 = vmax.f32 %v713, %v515
        %v1029 = vmax.f32 %v713, %v516
        %v1030 = vmax.f32 %v713, %v517
        %v1031 = vmax.f32 %v713, %v518
        %v1032 = vmax.f32 %v713, %v519
        %v1033 = vmax.f32 %v713, %v520
        %v1034 = vmax.f32 %v713, %v521
        %v1035 = vmax.f32 %v713, %v522
        %v1036 = vmax.f32 %v713, %v523
        %v1037 = vmax.f32 %v713, %v524
        %v1038 = vmax.f32 %v713, %v525
        %v1039 = vmax.f32 %v713, %v526
        %v1040 = vmax.f32 %v713, %v527
        %v1041 = vmax.f32 %v713, %v528
        %v1042 = vmax.f32 %v713, %v529
        %v1043 = vmax.f32 %v713, %v530
        %v1044 = vmax.f32 %v713, %v531
        %v1045 = vmax.f32 %v713, %v532
        %v1046 = vmax.f32 %v713, %v533
        %v1047 = vmax.f32 %v713, %v534
        %v1048 = vmax.f32 %v713, %v535
        %v1049 = vmax.f32 %v713, %v536
        %v1050 = vmax.f32 %v713, %v537
        %v1051 = vmax.f32 %v713, %v538
        %v1052 = vmax.f32 %v713, %v539
        %v1053 = vmax.f32 %v713, %v540
        %v1054 = vmax.f32 %v713, %v541
        %v1055 = vmax.f32 %v713, %v542
        %v1056 = vmax.f32 %v713, %v543
        %v1057 = vmax.f32 %v713, %v544
        %v1058 = vmax.f32 %v713, %v545
        %v1059 = vmax.f32 %v713, %v546
        %v1060 = vmax.f32 %v713, %v547
        %v1061 = vmax.f32 %v713, %v548
        %v1062 = vmax.f32 %v713, %v549
        %v1063 = vmax.f32 %v713, %v550
        %v1064 = vmax.f32 %v713, %v551
        %v1065 = vmax.f32 %v713, %v552
        %v1066 = vmax.f32 %v713, %v553
        %v1067 = vmax.f32 %v713, %v554
        %v1068 = vmax.f32 %v713, %v555
        %v1069 = vmax.f32 %v713, %v556
        %v1070 = vmax.f32 %v713, %v557
        %v1071 = vmax.f32 %v713, %v558
        %v1072 = vmax.f32 %v713, %v559
        %v1073 = vmax.f32 %v713, %v560
        %v1074 = vmax.f32 %v713, %v561
        %v1075 = vmax.f32 %v713, %v562
        %v1076 = vmax.f32 %v713, %v563
        %v1077 = vmax.f32 %v713, %v564
        %v1078 = vmax.f32 %v713, %v565
        %v1079 = vmax.f32 %v713, %v566
        %v1080 = vmax.f32 %v713, %v567
        %v1081 = vmax.f32 %v713, %v568
        %v1082 = vmax.f32 %v713, %v569
        %v1083 = vmax.f32 %v713, %v570
        %v1084 = vmax.f32 %v713, %v571
        %v1085 = vmax.f32 %v713, %v572
        %v1086 = vmax.f32 %v713, %v573
        %v1087 = vmax.f32 %v713, %v574
        %v1088 = vmax.f32 %v713, %v575
        %v1089 = vmax.f32 %v713, %v576
        %v1090 = vmax.f32 %v713, %v577
        %v1091 = vmax.f32 %v713, %v578
        %v1092 = vmax.f32 %v713, %v579
        %v1093 = vmax.f32 %v713, %v580
        %v1094 = vmax.f32 %v713, %v581
        %v1095 = vmax.f32 %v713, %v582
        %v1096 = vmax.f32 %v713, %v583
        %v1097 = vmax.f32 %v713, %v584
        %v1098 = vmax.f32 %v713, %v585
        %v1099 = vmax.f32 %v713, %v586
        %v1100 = vmax.f32 %v713, %v587
        %v1101 = vmax.f32 %v713, %v588
        %v1102 = vmax.f32 %v713, %v589
        %v1103 = vmax.f32 %v713, %v590
        %v1104 = vmax.f32 %v713, %v591
        %v1105 = vmax.f32 %v713, %v592
        %v1106 = vmax.f32 %v713, %v593
        %v1107 = vmax.f32 %v713, %v594
        %v1108 = vmax.f32 %v713, %v595
        %v1109 = vmax.f32 %v713, %v596
        %v1110 = vmax.f32 %v713, %v597
        %v1111 = vmax.f32 %v713, %v598
        %v1112 = vmax.f32 %v713, %v599
        %v1113 = vmax.f32 %v713, %v600
        %v1114 = vmax.f32 %v713, %v601
        %v1115 = vmax.f32 %v713, %v602
        %v1116 = vmax.f32 %v713, %v603
        %v1117 = vmax.f32 %v713, %v604
        %v1118 = vmax.f32 %v713, %v605
        %v1119 = vmax.f32 %v713, %v606
        %v1120 = vmax.f32 %v713, %v607
        %v1121 = vmax.f32 %v713, %v608
        %v1122 = vmax.f32 %v713, %v609
        %v1123 = vmax.f32 %v713, %v610
        %v1124 = vmax.f32 %v713, %v611
        %v1125 = vmax.f32 %v713, %v612
        %v1126 = vmax.f32 %v713, %v613
        %v1127 = vmax.f32 %v713, %v614
        %v1128 = vmax.f32 %v713, %v615
        %v1129 = vmax.f32 %v713, %v616
        %v1130 = vmax.f32 %v713, %v617
        %v1131 = vmax.f32 %v713, %v618
        %v1132 = vmax.f32 %v713, %v619
        %v1133 = vmax.f32 %v713, %v620
        %v1134 = vmax.f32 %v713, %v621
        %v1135 = vmax.f32 %v713, %v622
        %v1136 = vmax.f32 %v713, %v623
        %v1137 = vmax.f32 %v713, %v624
        %v1138 = vmax.f32 %v713, %v625
        %v1139 = vmax.f32 %v713, %v626
        %v1140 = vmax.f32 %v713, %v627
        %v1141 = vmax.f32 %v713, %v628
        %v1142 = vmax.f32 %v713, %v629
        %v1143 = vmax.f32 %v713, %v630
        %v1144 = vmax.f32 %v713, %v631
        %v1145 = vmax.f32 %v713, %v632
        %v1146 = vmax.f32 %v713, %v633
        %v1147 = vmax.f32 %v713, %v634
        %v1148 = vmax.f32 %v713, %v635
        %v1149 = vmax.f32 %v713, %v636
        %v1150 = vmax.f32 %v713, %v637
        %v1151 = vmax.f32 %v713, %v638
        %v1152 = vmax.f32 %v713, %v639
        %v1153 = vmax.f32 %v713, %v640
        %v1154 = vmax.f32 %v713, %v641
        %v1155 = vmax.f32 %v713, %v642
        %v1156 = vmax.f32 %v713, %v643
        %v1157 = vmax.f32 %v713, %v644
        %v1158 = vmax.f32 %v713, %v645
        %v1159 = vmax.f32 %v713, %v646
        %v1160 = vmax.f32 %v713, %v647
        %v1161 = vmax.f32 %v713, %v648
        %v1162 = vmax.f32 %v713, %v649
        %v1163 = vmax.f32 %v713, %v650
        %v1164 = vmax.f32 %v713, %v651
        %v1165 = vmax.f32 %v713, %v652
        %v1166 = vmax.f32 %v713, %v653
        %v1167 = vmax.f32 %v713, %v654
        %v1168 = vmax.f32 %v713, %v655
        %v1169 = vmax.f32 %v713, %v656
        %v1170 = vmax.f32 %v713, %v657
        %v1171 = vmax.f32 %v713, %v658
        %v1172 = vmax.f32 %v713, %v659
        %v1173 = vmax.f32 %v713, %v660
        %v1174 = vmax.f32 %v713, %v661
        %v1175 = vmax.f32 %v713, %v662
        %v1176 = vmax.f32 %v713, %v663
        %v1177 = vmax.f32 %v713, %v664
        %v1178 = vmax.f32 %v713, %v665
        %v1179 = vmax.f32 %v713, %v666
        %v1180 = vmax.f32 %v713, %v667
        %v1181 = vmax.f32 %v713, %v668
        %v1182 = vmax.f32 %v713, %v669
        %v1183 = vmax.f32 %v713, %v670
        %v1184 = vmax.f32 %v713, %v671
        %v1185 = vmax.f32 %v713, %v672
        %v1186 = vmax.f32 %v713, %v673
        %v1187 = vmax.f32 %v713, %v674
        %v1188 = vmax.f32 %v713, %v675
        %v1189 = vmax.f32 %v713, %v676
        %v1190 = vmax.f32 %v713, %v677
        %v1191 = vmax.f32 %v713, %v678
        %v1192 = vmax.f32 %v713, %v679
        %v1193 = vmax.f32 %v713, %v680
        %v1194 = vmax.f32 %v713, %v681
        %v1195 = vmax.f32 %v713, %v682
        %v1196 = vmax.f32 %v713, %v683
        %v1197 = vmax.f32 %v713, %v684
        %v1198 = vmax.f32 %v713, %v685
        %v1199 = vmax.f32 %v713, %v686
        %v1200 = vmax.f32 %v713, %v687
        %v1201 = vmax.f32 %v713, %v688
        %v1202 = vmax.f32 %v713, %v689
        %v1203 = vmax.f32 %v713, %v690
        %v1204 = vmax.f32 %v713, %v691
        %v1205 = vmax.f32 %v713, %v692
        %v1206 = vmax.f32 %v713, %v693
        %v1207 = vmax.f32 %v713, %v694
        %v1208 = vmax.f32 %v713, %v695
        %v1209 = vmax.f32 %v713, %v696
        %v1210 = vmax.f32 %v713, %v697
        %v1211 = vmax.f32 %v713, %v698
        %v1212 = vmax.f32 %v713, %v699
        %v1213 = vmax.f32 %v713, %v700
        %v1214 = vmax.f32 %v713, %v701
        %v1215 = vmax.f32 %v713, %v702
        %v1216 = vmax.f32 %v713, %v703
        %v1217 = vmax.f32 %v713, %v704
        %v1218 = vmax.f32 %v713, %v705
        %v1219 = vmax.f32 %v713, %v706
        %v1220 = vmax.f32 %v713, %v707
        %v1221 = vmax.f32 %v713, %v708
        %v1222 = vmax.f32 %v713, %v709
        %v1223 = vmax.f32 %v713, %v710
        %v1224 = vmax.f32 %v713, %v711
        %v1225 = vmax.f32 %v713, %v712
        %v1226 = vstv %s200
        %v1227 = vmin.f32 %v1226, %v714
        %v1228 = vmin.f32 %v1226, %v715
        %v1229 = vmin.f32 %v1226, %v716
        %v1230 = vmin.f32 %v1226, %v717
        %v1231 = vmin.f32 %v1226, %v718
        %v1232 = vmin.f32 %v1226, %v719
        %v1233 = vmin.f32 %v1226, %v720
        %v1234 = vmin.f32 %v1226, %v721
        %v1235 = vmin.f32 %v1226, %v722
        %v1236 = vmin.f32 %v1226, %v723
        %v1237 = vmin.f32 %v1226, %v724
        %v1238 = vmin.f32 %v1226, %v725
        %v1239 = vmin.f32 %v1226, %v726
        %v1240 = vmin.f32 %v1226, %v727
        %v1241 = vmin.f32 %v1226, %v728
        %v1242 = vmin.f32 %v1226, %v729
        %v1243 = vmin.f32 %v1226, %v730
        %v1244 = vmin.f32 %v1226, %v731
        %v1245 = vmin.f32 %v1226, %v732
        %v1246 = vmin.f32 %v1226, %v733
        %v1247 = vmin.f32 %v1226, %v734
        %v1248 = vmin.f32 %v1226, %v735
        %v1249 = vmin.f32 %v1226, %v736
        %v1250 = vmin.f32 %v1226, %v737
        %v1251 = vmin.f32 %v1226, %v738
        %v1252 = vmin.f32 %v1226, %v739
        %v1253 = vmin.f32 %v1226, %v740
        %v1254 = vmin.f32 %v1226, %v741
        %v1255 = vmin.f32 %v1226, %v742
        %v1256 = vmin.f32 %v1226, %v743
        %v1257 = vmin.f32 %v1226, %v744
        %v1258 = vmin.f32 %v1226, %v745
        %v1259 = vmin.f32 %v1226, %v746
        %v1260 = vmin.f32 %v1226, %v747
        %v1261 = vmin.f32 %v1226, %v748
        %v1262 = vmin.f32 %v1226, %v749
        %v1263 = vmin.f32 %v1226, %v750
        %v1264 = vmin.f32 %v1226, %v751
        %v1265 = vmin.f32 %v1226, %v752
        %v1266 = vmin.f32 %v1226, %v753
        %v1267 = vmin.f32 %v1226, %v754
        %v1268 = vmin.f32 %v1226, %v755
        %v1269 = vmin.f32 %v1226, %v756
        %v1270 = vmin.f32 %v1226, %v757
        %v1271 = vmin.f32 %v1226, %v758
        %v1272 = vmin.f32 %v1226, %v759
        %v1273 = vmin.f32 %v1226, %v760
        %v1274 = vmin.f32 %v1226, %v761
        %v1275 = vmin.f32 %v1226, %v762
        %v1276 = vmin.f32 %v1226, %v763
        %v1277 = vmin.f32 %v1226, %v764
        %v1278 = vmin.f32 %v1226, %v765
        %v1279 = vmin.f32 %v1226, %v766
        %v1280 = vmin.f32 %v1226, %v767
        %v1281 = vmin.f32 %v1226, %v768
        %v1282 = vmin.f32 %v1226, %v769
        %v1283 = vmin.f32 %v1226, %v770
        %v1284 = vmin.f32 %v1226, %v771
        %v1285 = vmin.f32 %v1226, %v772
        %v1286 = vmin.f32 %v1226, %v773
        %v1287 = vmin.f32 %v1226, %v774
        %v1288 = vmin.f32 %v1226, %v775
        %v1289 = vmin.f32 %v1226, %v776
        %v1290 = vmin.f32 %v1226, %v777
        %v1291 = vmin.f32 %v1226, %v778
        %v1292 = vmin.f32 %v1226, %v779
        %v1293 = vmin.f32 %v1226, %v780
        %v1294 = vmin.f32 %v1226, %v781
        %v1295 = vmin.f32 %v1226, %v782
        %v1296 = vmin.f32 %v1226, %v783
        %v1297 = vmin.f32 %v1226, %v784
        %v1298 = vmin.f32 %v1226, %v785
        %v1299 = vmin.f32 %v1226, %v786
        %v1300 = vmin.f32 %v1226, %v787
        %v1301 = vmin.f32 %v1226, %v788
        %v1302 = vmin.f32 %v1226, %v789
        %v1303 = vmin.f32 %v1226, %v790
        %v1304 = vmin.f32 %v1226, %v791
        %v1305 = vmin.f32 %v1226, %v792
        %v1306 = vmin.f32 %v1226, %v793
        %v1307 = vmin.f32 %v1226, %v794
        %v1308 = vmin.f32 %v1226, %v795
        %v1309 = vmin.f32 %v1226, %v796
        %v1310 = vmin.f32 %v1226, %v797
        %v1311 = vmin.f32 %v1226, %v798
        %v1312 = vmin.f32 %v1226, %v799
        %v1313 = vmin.f32 %v1226, %v800
        %v1314 = vmin.f32 %v1226, %v801
        %v1315 = vmin.f32 %v1226, %v802
        %v1316 = vmin.f32 %v1226, %v803
        %v1317 = vmin.f32 %v1226, %v804
        %v1318 = vmin.f32 %v1226, %v805
        %v1319 = vmin.f32 %v1226, %v806
        %v1320 = vmin.f32 %v1226, %v807
        %v1321 = vmin.f32 %v1226, %v808
        %v1322 = vmin.f32 %v1226, %v809
        %v1323 = vmin.f32 %v1226, %v810
        %v1324 = vmin.f32 %v1226, %v811
        %v1325 = vmin.f32 %v1226, %v812
        %v1326 = vmin.f32 %v1226, %v813
        %v1327 = vmin.f32 %v1226, %v814
        %v1328 = vmin.f32 %v1226, %v815
        %v1329 = vmin.f32 %v1226, %v816
        %v1330 = vmin.f32 %v1226, %v817
        %v1331 = vmin.f32 %v1226, %v818
        %v1332 = vmin.f32 %v1226, %v819
        %v1333 = vmin.f32 %v1226, %v820
        %v1334 = vmin.f32 %v1226, %v821
        %v1335 = vmin.f32 %v1226, %v822
        %v1336 = vmin.f32 %v1226, %v823
        %v1337 = vmin.f32 %v1226, %v824
        %v1338 = vmin.f32 %v1226, %v825
        %v1339 = vmin.f32 %v1226, %v826
        %v1340 = vmin.f32 %v1226, %v827
        %v1341 = vmin.f32 %v1226, %v828
        %v1342 = vmin.f32 %v1226, %v829
        %v1343 = vmin.f32 %v1226, %v830
        %v1344 = vmin.f32 %v1226, %v831
        %v1345 = vmin.f32 %v1226, %v832
        %v1346 = vmin.f32 %v1226, %v833
        %v1347 = vmin.f32 %v1226, %v834
        %v1348 = vmin.f32 %v1226, %v835
        %v1349 = vmin.f32 %v1226, %v836
        %v1350 = vmin.f32 %v1226, %v837
        %v1351 = vmin.f32 %v1226, %v838
        %v1352 = vmin.f32 %v1226, %v839
        %v1353 = vmin.f32 %v1226, %v840
        %v1354 = vmin.f32 %v1226, %v841
        %v1355 = vmin.f32 %v1226, %v842
        %v1356 = vmin.f32 %v1226, %v843
        %v1357 = vmin.f32 %v1226, %v844
        %v1358 = vmin.f32 %v1226, %v845
        %v1359 = vmin.f32 %v1226, %v846
        %v1360 = vmin.f32 %v1226, %v847
        %v1361 = vmin.f32 %v1226, %v848
        %v1362 = vmin.f32 %v1226, %v849
        %v1363 = vmin.f32 %v1226, %v850
        %v1364 = vmin.f32 %v1226, %v851
        %v1365 = vmin.f32 %v1226, %v852
        %v1366 = vmin.f32 %v1226, %v853
        %v1367 = vmin.f32 %v1226, %v854
        %v1368 = vmin.f32 %v1226, %v855
        %v1369 = vmin.f32 %v1226, %v856
        %v1370 = vmin.f32 %v1226, %v857
        %v1371 = vmin.f32 %v1226, %v858
        %v1372 = vmin.f32 %v1226, %v859
        %v1373 = vmin.f32 %v1226, %v860
        %v1374 = vmin.f32 %v1226, %v861
        %v1375 = vmin.f32 %v1226, %v862
        %v1376 = vmin.f32 %v1226, %v863
        %v1377 = vmin.f32 %v1226, %v864
        %v1378 = vmin.f32 %v1226, %v865
        %v1379 = vmin.f32 %v1226, %v866
        %v1380 = vmin.f32 %v1226, %v867
        %v1381 = vmin.f32 %v1226, %v868
        %v1382 = vmin.f32 %v1226, %v869
        %v1383 = vmin.f32 %v1226, %v870
        %v1384 = vmin.f32 %v1226, %v871
        %v1385 = vmin.f32 %v1226, %v872
        %v1386 = vmin.f32 %v1226, %v873
        %v1387 = vmin.f32 %v1226, %v874
        %v1388 = vmin.f32 %v1226, %v875
        %v1389 = vmin.f32 %v1226, %v876
        %v1390 = vmin.f32 %v1226, %v877
        %v1391 = vmin.f32 %v1226, %v878
        %v1392 = vmin.f32 %v1226, %v879
        %v1393 = vmin.f32 %v1226, %v880
        %v1394 = vmin.f32 %v1226, %v881
        %v1395 = vmin.f32 %v1226, %v882
        %v1396 = vmin.f32 %v1226, %v883
        %v1397 = vmin.f32 %v1226, %v884
        %v1398 = vmin.f32 %v1226, %v885
        %v1399 = vmin.f32 %v1226, %v886
        %v1400 = vmin.f32 %v1226, %v887
        %v1401 = vmin.f32 %v1226, %v888
        %v1402 = vmin.f32 %v1226, %v889
        %v1403 = vmin.f32 %v1226, %v890
        %v1404 = vmin.f32 %v1226, %v891
        %v1405 = vmin.f32 %v1226, %v892
        %v1406 = vmin.f32 %v1226, %v893
        %v1407 = vmin.f32 %v1226, %v894
        %v1408 = vmin.f32 %v1226, %v895
        %v1409 = vmin.f32 %v1226, %v896
        %v1410 = vmin.f32 %v1226, %v897
        %v1411 = vmin.f32 %v1226, %v898
        %v1412 = vmin.f32 %v1226, %v899
        %v1413 = vmin.f32 %v1226, %v900
        %v1414 = vmin.f32 %v1226, %v901
        %v1415 = vmin.f32 %v1226, %v902
        %v1416 = vmin.f32 %v1226, %v903
        %v1417 = vmin.f32 %v1226, %v904
        %v1418 = vmin.f32 %v1226, %v905
        %v1419 = vmin.f32 %v1226, %v906
        %v1420 = vmin.f32 %v1226, %v907
        %v1421 = vmin.f32 %v1226, %v908
        %v1422 = vmin.f32 %v1226, %v909
        %v1423 = vmin.f32 %v1226, %v910
        %v1424 = vmin.f32 %v1226, %v911
        %v1425 = vmin.f32 %v1226, %v912
        %v1426 = vmin.f32 %v1226, %v913
        %v1427 = vmin.f32 %v1226, %v914
        %v1428 = vmin.f32 %v1226, %v915
        %v1429 = vmin.f32 %v1226, %v916
        %v1430 = vmin.f32 %v1226, %v917
        %v1431 = vmin.f32 %v1226, %v918
        %v1432 = vmin.f32 %v1226, %v919
        %v1433 = vmin.f32 %v1226, %v920
        %v1434 = vmin.f32 %v1226, %v921
        %v1435 = vmin.f32 %v1226, %v922
        %v1436 = vmin.f32 %v1226, %v923
        %v1437 = vmin.f32 %v1226, %v924
        %v1438 = vmin.f32 %v1226, %v925
        %v1439 = vmin.f32 %v1226, %v926
        %v1440 = vmin.f32 %v1226, %v927
        %v1441 = vmin.f32 %v1226, %v928
        %v1442 = vmin.f32 %v1226, %v929
        %v1443 = vmin.f32 %v1226, %v930
        %v1444 = vmin.f32 %v1226, %v931
        %v1445 = vmin.f32 %v1226, %v932
        %v1446 = vmin.f32 %v1226, %v933
        %v1447 = vmin.f32 %v1226, %v934
        %v1448 = vmin.f32 %v1226, %v935
        %v1449 = vmin.f32 %v1226, %v936
        %v1450 = vmin.f32 %v1226, %v937
        %v1451 = vmin.f32 %v1226, %v938
        %v1452 = vmin.f32 %v1226, %v939
        %v1453 = vmin.f32 %v1226, %v940
        %v1454 = vmin.f32 %v1226, %v941
        %v1455 = vmin.f32 %v1226, %v942
        %v1456 = vmin.f32 %v1226, %v943
        %v1457 = vmin.f32 %v1226, %v944
        %v1458 = vmin.f32 %v1226, %v945
        %v1459 = vmin.f32 %v1226, %v946
        %v1460 = vmin.f32 %v1226, %v947
        %v1461 = vmin.f32 %v1226, %v948
        %v1462 = vmin.f32 %v1226, %v949
        %v1463 = vmin.f32 %v1226, %v950
        %v1464 = vmin.f32 %v1226, %v951
        %v1465 = vmin.f32 %v1226, %v952
        %v1466 = vmin.f32 %v1226, %v953
        %v1467 = vmin.f32 %v1226, %v954
        %v1468 = vmin.f32 %v1226, %v955
        %v1469 = vmin.f32 %v1226, %v956
        %v1470 = vmin.f32 %v1226, %v957
        %v1471 = vmin.f32 %v1226, %v958
        %v1472 = vmin.f32 %v1226, %v959
        %v1473 = vmin.f32 %v1226, %v960
        %v1474 = vmin.f32 %v1226, %v961
        %v1475 = vmin.f32 %v1226, %v962
        %v1476 = vmin.f32 %v1226, %v963
        %v1477 = vmin.f32 %v1226, %v964
        %v1478 = vmin.f32 %v1226, %v965
        %v1479 = vmin.f32 %v1226, %v966
        %v1480 = vmin.f32 %v1226, %v967
        %v1481 = vmin.f32 %v1226, %v968
        %v1482 = vmin.f32 %v1226, %v969
        %v1483 = vmin.f32 %v1226, %v970
        %v1484 = vmin.f32 %v1226, %v971
        %v1485 = vmin.f32 %v1226, %v972
        %v1486 = vmin.f32 %v1226, %v973
        %v1487 = vmin.f32 %v1226, %v974
        %v1488 = vmin.f32 %v1226, %v975
        %v1489 = vmin.f32 %v1226, %v976
        %v1490 = vmin.f32 %v1226, %v977
        %v1491 = vmin.f32 %v1226, %v978
        %v1492 = vmin.f32 %v1226, %v979
        %v1493 = vmin.f32 %v1226, %v980
        %v1494 = vmin.f32 %v1226, %v981
        %v1495 = vmin.f32 %v1226, %v982
        %v1496 = vmin.f32 %v1226, %v983
        %v1497 = vmin.f32 %v1226, %v984
        %v1498 = vmin.f32 %v1226, %v985
        %v1499 = vmin.f32 %v1226, %v986
        %v1500 = vmin.f32 %v1226, %v987
        %v1501 = vmin.f32 %v1226, %v988
        %v1502 = vmin.f32 %v1226, %v989
        %v1503 = vmin.f32 %v1226, %v990
        %v1504 = vmin.f32 %v1226, %v991
        %v1505 = vmin.f32 %v1226, %v992
        %v1506 = vmin.f32 %v1226, %v993
        %v1507 = vmin.f32 %v1226, %v994
        %v1508 = vmin.f32 %v1226, %v995
        %v1509 = vmin.f32 %v1226, %v996
        %v1510 = vmin.f32 %v1226, %v997
        %v1511 = vmin.f32 %v1226, %v998
        %v1512 = vmin.f32 %v1226, %v999
        %v1513 = vmin.f32 %v1226, %v1000
        %v1514 = vmin.f32 %v1226, %v1001
        %v1515 = vmin.f32 %v1226, %v1002
        %v1516 = vmin.f32 %v1226, %v1003
        %v1517 = vmin.f32 %v1226, %v1004
        %v1518 = vmin.f32 %v1226, %v1005
        %v1519 = vmin.f32 %v1226, %v1006
        %v1520 = vmin.f32 %v1226, %v1007
        %v1521 = vmin.f32 %v1226, %v1008
        %v1522 = vmin.f32 %v1226, %v1009
        %v1523 = vmin.f32 %v1226, %v1010
        %v1524 = vmin.f32 %v1226, %v1011
        %v1525 = vmin.f32 %v1226, %v1012
        %v1526 = vmin.f32 %v1226, %v1013
        %v1527 = vmin.f32 %v1226, %v1014
        %v1528 = vmin.f32 %v1226, %v1015
        %v1529 = vmin.f32 %v1226, %v1016
        %v1530 = vmin.f32 %v1226, %v1017
        %v1531 = vmin.f32 %v1226, %v1018
        %v1532 = vmin.f32 %v1226, %v1019
        %v1533 = vmin.f32 %v1226, %v1020
        %v1534 = vmin.f32 %v1226, %v1021
        %v1535 = vmin.f32 %v1226, %v1022
        %v1536 = vmin.f32 %v1226, %v1023
        %v1537 = vmin.f32 %v1226, %v1024
        %v1538 = vmin.f32 %v1226, %v1025
        %v1539 = vmin.f32 %v1226, %v1026
        %v1540 = vmin.f32 %v1226, %v1027
        %v1541 = vmin.f32 %v1226, %v1028
        %v1542 = vmin.f32 %v1226, %v1029
        %v1543 = vmin.f32 %v1226, %v1030
        %v1544 = vmin.f32 %v1226, %v1031
        %v1545 = vmin.f32 %v1226, %v1032
        %v1546 = vmin.f32 %v1226, %v1033
        %v1547 = vmin.f32 %v1226, %v1034
        %v1548 = vmin.f32 %v1226, %v1035
        %v1549 = vmin.f32 %v1226, %v1036
        %v1550 = vmin.f32 %v1226, %v1037
        %v1551 = vmin.f32 %v1226, %v1038
        %v1552 = vmin.f32 %v1226, %v1039
        %v1553 = vmin.f32 %v1226, %v1040
        %v1554 = vmin.f32 %v1226, %v1041
        %v1555 = vmin.f32 %v1226, %v1042
        %v1556 = vmin.f32 %v1226, %v1043
        %v1557 = vmin.f32 %v1226, %v1044
        %v1558 = vmin.f32 %v1226, %v1045
        %v1559 = vmin.f32 %v1226, %v1046
        %v1560 = vmin.f32 %v1226, %v1047
        %v1561 = vmin.f32 %v1226, %v1048
        %v1562 = vmin.f32 %v1226, %v1049
        %v1563 = vmin.f32 %v1226, %v1050
        %v1564 = vmin.f32 %v1226, %v1051
        %v1565 = vmin.f32 %v1226, %v1052
        %v1566 = vmin.f32 %v1226, %v1053
        %v1567 = vmin.f32 %v1226, %v1054
        %v1568 = vmin.f32 %v1226, %v1055
        %v1569 = vmin.f32 %v1226, %v1056
        %v1570 = vmin.f32 %v1226, %v1057
        %v1571 = vmin.f32 %v1226, %v1058
        %v1572 = vmin.f32 %v1226, %v1059
        %v1573 = vmin.f32 %v1226, %v1060
        %v1574 = vmin.f32 %v1226, %v1061
        %v1575 = vmin.f32 %v1226, %v1062
        %v1576 = vmin.f32 %v1226, %v1063
        %v1577 = vmin.f32 %v1226, %v1064
        %v1578 = vmin.f32 %v1226, %v1065
        %v1579 = vmin.f32 %v1226, %v1066
        %v1580 = vmin.f32 %v1226, %v1067
        %v1581 = vmin.f32 %v1226, %v1068
        %v1582 = vmin.f32 %v1226, %v1069
        %v1583 = vmin.f32 %v1226, %v1070
        %v1584 = vmin.f32 %v1226, %v1071
        %v1585 = vmin.f32 %v1226, %v1072
        %v1586 = vmin.f32 %v1226, %v1073
        %v1587 = vmin.f32 %v1226, %v1074
        %v1588 = vmin.f32 %v1226, %v1075
        %v1589 = vmin.f32 %v1226, %v1076
        %v1590 = vmin.f32 %v1226, %v1077
        %v1591 = vmin.f32 %v1226, %v1078
        %v1592 = vmin.f32 %v1226, %v1079
        %v1593 = vmin.f32 %v1226, %v1080
        %v1594 = vmin.f32 %v1226, %v1081
        %v1595 = vmin.f32 %v1226, %v1082
        %v1596 = vmin.f32 %v1226, %v1083
        %v1597 = vmin.f32 %v1226, %v1084
        %v1598 = vmin.f32 %v1226, %v1085
        %v1599 = vmin.f32 %v1226, %v1086
        %v1600 = vmin.f32 %v1226, %v1087
        %v1601 = vmin.f32 %v1226, %v1088
        %v1602 = vmin.f32 %v1226, %v1089
        %v1603 = vmin.f32 %v1226, %v1090
        %v1604 = vmin.f32 %v1226, %v1091
        %v1605 = vmin.f32 %v1226, %v1092
        %v1606 = vmin.f32 %v1226, %v1093
        %v1607 = vmin.f32 %v1226, %v1094
        %v1608 = vmin.f32 %v1226, %v1095
        %v1609 = vmin.f32 %v1226, %v1096
        %v1610 = vmin.f32 %v1226, %v1097
        %v1611 = vmin.f32 %v1226, %v1098
        %v1612 = vmin.f32 %v1226, %v1099
        %v1613 = vmin.f32 %v1226, %v1100
        %v1614 = vmin.f32 %v1226, %v1101
        %v1615 = vmin.f32 %v1226, %v1102
        %v1616 = vmin.f32 %v1226, %v1103
        %v1617 = vmin.f32 %v1226, %v1104
        %v1618 = vmin.f32 %v1226, %v1105
        %v1619 = vmin.f32 %v1226, %v1106
        %v1620 = vmin.f32 %v1226, %v1107
        %v1621 = vmin.f32 %v1226, %v1108
        %v1622 = vmin.f32 %v1226, %v1109
        %v1623 = vmin.f32 %v1226, %v1110
        %v1624 = vmin.f32 %v1226, %v1111
        %v1625 = vmin.f32 %v1226, %v1112
        %v1626 = vmin.f32 %v1226, %v1113
        %v1627 = vmin.f32 %v1226, %v1114
        %v1628 = vmin.f32 %v1226, %v1115
        %v1629 = vmin.f32 %v1226, %v1116
        %v1630 = vmin.f32 %v1226, %v1117
        %v1631 = vmin.f32 %v1226, %v1118
        %v1632 = vmin.f32 %v1226, %v1119
        %v1633 = vmin.f32 %v1226, %v1120
        %v1634 = vmin.f32 %v1226, %v1121
        %v1635 = vmin.f32 %v1226, %v1122
        %v1636 = vmin.f32 %v1226, %v1123
        %v1637 = vmin.f32 %v1226, %v1124
        %v1638 = vmin.f32 %v1226, %v1125
        %v1639 = vmin.f32 %v1226, %v1126
        %v1640 = vmin.f32 %v1226, %v1127
        %v1641 = vmin.f32 %v1226, %v1128
        %v1642 = vmin.f32 %v1226, %v1129
        %v1643 = vmin.f32 %v1226, %v1130
        %v1644 = vmin.f32 %v1226, %v1131
        %v1645 = vmin.f32 %v1226, %v1132
        %v1646 = vmin.f32 %v1226, %v1133
        %v1647 = vmin.f32 %v1226, %v1134
        %v1648 = vmin.f32 %v1226, %v1135
        %v1649 = vmin.f32 %v1226, %v1136
        %v1650 = vmin.f32 %v1226, %v1137
        %v1651 = vmin.f32 %v1226, %v1138
        %v1652 = vmin.f32 %v1226, %v1139
        %v1653 = vmin.f32 %v1226, %v1140
        %v1654 = vmin.f32 %v1226, %v1141
        %v1655 = vmin.f32 %v1226, %v1142
        %v1656 = vmin.f32 %v1226, %v1143
        %v1657 = vmin.f32 %v1226, %v1144
        %v1658 = vmin.f32 %v1226, %v1145
        %v1659 = vmin.f32 %v1226, %v1146
        %v1660 = vmin.f32 %v1226, %v1147
        %v1661 = vmin.f32 %v1226, %v1148
        %v1662 = vmin.f32 %v1226, %v1149
        %v1663 = vmin.f32 %v1226, %v1150
        %v1664 = vmin.f32 %v1226, %v1151
        %v1665 = vmin.f32 %v1226, %v1152
        %v1666 = vmin.f32 %v1226, %v1153
        %v1667 = vmin.f32 %v1226, %v1154
        %v1668 = vmin.f32 %v1226, %v1155
        %v1669 = vmin.f32 %v1226, %v1156
        %v1670 = vmin.f32 %v1226, %v1157
        %v1671 = vmin.f32 %v1226, %v1158
        %v1672 = vmin.f32 %v1226, %v1159
        %v1673 = vmin.f32 %v1226, %v1160
        %v1674 = vmin.f32 %v1226, %v1161
        %v1675 = vmin.f32 %v1226, %v1162
        %v1676 = vmin.f32 %v1226, %v1163
        %v1677 = vmin.f32 %v1226, %v1164
        %v1678 = vmin.f32 %v1226, %v1165
        %v1679 = vmin.f32 %v1226, %v1166
        %v1680 = vmin.f32 %v1226, %v1167
        %v1681 = vmin.f32 %v1226, %v1168
        %v1682 = vmin.f32 %v1226, %v1169
        %v1683 = vmin.f32 %v1226, %v1170
        %v1684 = vmin.f32 %v1226, %v1171
        %v1685 = vmin.f32 %v1226, %v1172
        %v1686 = vmin.f32 %v1226, %v1173
        %v1687 = vmin.f32 %v1226, %v1174
        %v1688 = vmin.f32 %v1226, %v1175
        %v1689 = vmin.f32 %v1226, %v1176
        %v1690 = vmin.f32 %v1226, %v1177
        %v1691 = vmin.f32 %v1226, %v1178
        %v1692 = vmin.f32 %v1226, %v1179
        %v1693 = vmin.f32 %v1226, %v1180
        %v1694 = vmin.f32 %v1226, %v1181
        %v1695 = vmin.f32 %v1226, %v1182
        %v1696 = vmin.f32 %v1226, %v1183
        %v1697 = vmin.f32 %v1226, %v1184
        %v1698 = vmin.f32 %v1226, %v1185
        %v1699 = vmin.f32 %v1226, %v1186
        %v1700 = vmin.f32 %v1226, %v1187
        %v1701 = vmin.f32 %v1226, %v1188
        %v1702 = vmin.f32 %v1226, %v1189
        %v1703 = vmin.f32 %v1226, %v1190
        %v1704 = vmin.f32 %v1226, %v1191
        %v1705 = vmin.f32 %v1226, %v1192
        %v1706 = vmin.f32 %v1226, %v1193
        %v1707 = vmin.f32 %v1226, %v1194
        %v1708 = vmin.f32 %v1226, %v1195
        %v1709 = vmin.f32 %v1226, %v1196
        %v1710 = vmin.f32 %v1226, %v1197
        %v1711 = vmin.f32 %v1226, %v1198
        %v1712 = vmin.f32 %v1226, %v1199
        %v1713 = vmin.f32 %v1226, %v1200
        %v1714 = vmin.f32 %v1226, %v1201
        %v1715 = vmin.f32 %v1226, %v1202
        %v1716 = vmin.f32 %v1226, %v1203
        %v1717 = vmin.f32 %v1226, %v1204
        %v1718 = vmin.f32 %v1226, %v1205
        %v1719 = vmin.f32 %v1226, %v1206
        %v1720 = vmin.f32 %v1226, %v1207
        %v1721 = vmin.f32 %v1226, %v1208
        %v1722 = vmin.f32 %v1226, %v1209
        %v1723 = vmin.f32 %v1226, %v1210
        %v1724 = vmin.f32 %v1226, %v1211
        %v1725 = vmin.f32 %v1226, %v1212
        %v1726 = vmin.f32 %v1226, %v1213
        %v1727 = vmin.f32 %v1226, %v1214
        %v1728 = vmin.f32 %v1226, %v1215
        %v1729 = vmin.f32 %v1226, %v1216
        %v1730 = vmin.f32 %v1226, %v1217
        %v1731 = vmin.f32 %v1226, %v1218
        %v1732 = vmin.f32 %v1226, %v1219
        %v1733 = vmin.f32 %v1226, %v1220
        %v1734 = vmin.f32 %v1226, %v1221
        %v1735 = vmin.f32 %v1226, %v1222
        %v1736 = vmin.f32 %v1226, %v1223
        %v1737 = vmin.f32 %v1226, %v1224
        %v1738 = vmin.f32 %v1226, %v1225
        %1739 = vst [vmem:[%s186] sm:$0xff] %v1227
        %1740 = vst [vmem:[%s186 + $0x8] sm:$0xff] %v1228
        %1741 = vst [vmem:[%s186 + $0x10] sm:$0xff] %v1229
        %1742 = vst [vmem:[%s186 + $0x18] sm:$0xff] %v1230
        %1743 = vst [vmem:[%s186 + $0x20] sm:$0xff] %v1231
        %1744 = vst [vmem:[%s186 + $0x28] sm:$0xff] %v1232
        %1745 = vst [vmem:[%s186 + $0x30] sm:$0xff] %v1233
        %1746 = vst [vmem:[%s186 + $0x38] sm:$0xff] %v1234
        %1747 = vst [vmem:[%s186 + $0x40] sm:$0xff] %v1235
        %1748 = vst [vmem:[%s186 + $0x48] sm:$0xff] %v1236
        %1749 = vst [vmem:[%s186 + $0x50] sm:$0xff] %v1237
        %1750 = vst [vmem:[%s186 + $0x58] sm:$0xff] %v1238
        %1751 = vst [vmem:[%s186 + $0x60] sm:$0xff] %v1239
        %1752 = vst [vmem:[%s186 + $0x68] sm:$0xff] %v1240
        %1753 = vst [vmem:[%s186 + $0x70] sm:$0xff] %v1241
        %1754 = vst [vmem:[%s186 + $0x78] sm:$0xff] %v1242
        %1755 = vst [vmem:[%s186 + $0x80] sm:$0xff] %v1243
        %1756 = vst [vmem:[%s186 + $0x88] sm:$0xff] %v1244
        %1757 = vst [vmem:[%s186 + $0x90] sm:$0xff] %v1245
        %1758 = vst [vmem:[%s186 + $0x98] sm:$0xff] %v1246
        %1759 = vst [vmem:[%s186 + $0xa0] sm:$0xff] %v1247
        %1760 = vst [vmem:[%s186 + $0xa8] sm:$0xff] %v1248
        %1761 = vst [vmem:[%s186 + $0xb0] sm:$0xff] %v1249
        %1762 = vst [vmem:[%s186 + $0xb8] sm:$0xff] %v1250
        %1763 = vst [vmem:[%s186 + $0xc0] sm:$0xff] %v1251
        %1764 = vst [vmem:[%s186 + $0xc8] sm:$0xff] %v1252
        %1765 = vst [vmem:[%s186 + $0xd0] sm:$0xff] %v1253
        %1766 = vst [vmem:[%s186 + $0xd8] sm:$0xff] %v1254
        %1767 = vst [vmem:[%s186 + $0xe0] sm:$0xff] %v1255
        %1768 = vst [vmem:[%s186 + $0xe8] sm:$0xff] %v1256
        %1769 = vst [vmem:[%s186 + $0xf0] sm:$0xff] %v1257
        %1770 = vst [vmem:[%s186 + $0xf8] sm:$0xff] %v1258
        %1771 = vst [vmem:[%s186 + $0x100] sm:$0xff] %v1259
        %1772 = vst [vmem:[%s186 + $0x108] sm:$0xff] %v1260
        %1773 = vst [vmem:[%s186 + $0x110] sm:$0xff] %v1261
        %1774 = vst [vmem:[%s186 + $0x118] sm:$0xff] %v1262
        %1775 = vst [vmem:[%s186 + $0x120] sm:$0xff] %v1263
        %1776 = vst [vmem:[%s186 + $0x128] sm:$0xff] %v1264
        %1777 = vst [vmem:[%s186 + $0x130] sm:$0xff] %v1265
        %1778 = vst [vmem:[%s186 + $0x138] sm:$0xff] %v1266
        %1779 = vst [vmem:[%s186 + $0x140] sm:$0xff] %v1267
        %1780 = vst [vmem:[%s186 + $0x148] sm:$0xff] %v1268
        %1781 = vst [vmem:[%s186 + $0x150] sm:$0xff] %v1269
        %1782 = vst [vmem:[%s186 + $0x158] sm:$0xff] %v1270
        %1783 = vst [vmem:[%s186 + $0x160] sm:$0xff] %v1271
        %1784 = vst [vmem:[%s186 + $0x168] sm:$0xff] %v1272
        %1785 = vst [vmem:[%s186 + $0x170] sm:$0xff] %v1273
        %1786 = vst [vmem:[%s186 + $0x178] sm:$0xff] %v1274
        %1787 = vst [vmem:[%s186 + $0x180] sm:$0xff] %v1275
        %1788 = vst [vmem:[%s186 + $0x188] sm:$0xff] %v1276
        %1789 = vst [vmem:[%s186 + $0x190] sm:$0xff] %v1277
        %1790 = vst [vmem:[%s186 + $0x198] sm:$0xff] %v1278
        %1791 = vst [vmem:[%s186 + $0x1a0] sm:$0xff] %v1279
        %1792 = vst [vmem:[%s186 + $0x1a8] sm:$0xff] %v1280
        %1793 = vst [vmem:[%s186 + $0x1b0] sm:$0xff] %v1281
        %1794 = vst [vmem:[%s186 + $0x1b8] sm:$0xff] %v1282
        %1795 = vst [vmem:[%s186 + $0x1c0] sm:$0xff] %v1283
        %1796 = vst [vmem:[%s186 + $0x1c8] sm:$0xff] %v1284
        %1797 = vst [vmem:[%s186 + $0x1d0] sm:$0xff] %v1285
        %1798 = vst [vmem:[%s186 + $0x1d8] sm:$0xff] %v1286
        %1799 = vst [vmem:[%s186 + $0x1e0] sm:$0xff] %v1287
        %1800 = vst [vmem:[%s186 + $0x1e8] sm:$0xff] %v1288
        %1801 = vst [vmem:[%s186 + $0x1f0] sm:$0xff] %v1289
        %1802 = vst [vmem:[%s186 + $0x1f8] sm:$0xff] %v1290
        %1803 = vst [vmem:[%s186 + $0x200] sm:$0xff] %v1291
        %1804 = vst [vmem:[%s186 + $0x208] sm:$0xff] %v1292
        %1805 = vst [vmem:[%s186 + $0x210] sm:$0xff] %v1293
        %1806 = vst [vmem:[%s186 + $0x218] sm:$0xff] %v1294
        %1807 = vst [vmem:[%s186 + $0x220] sm:$0xff] %v1295
        %1808 = vst [vmem:[%s186 + $0x228] sm:$0xff] %v1296
        %1809 = vst [vmem:[%s186 + $0x230] sm:$0xff] %v1297
        %1810 = vst [vmem:[%s186 + $0x238] sm:$0xff] %v1298
        %1811 = vst [vmem:[%s186 + $0x240] sm:$0xff] %v1299
        %1812 = vst [vmem:[%s186 + $0x248] sm:$0xff] %v1300
        %1813 = vst [vmem:[%s186 + $0x250] sm:$0xff] %v1301
        %1814 = vst [vmem:[%s186 + $0x258] sm:$0xff] %v1302
        %1815 = vst [vmem:[%s186 + $0x260] sm:$0xff] %v1303
        %1816 = vst [vmem:[%s186 + $0x268] sm:$0xff] %v1304
        %1817 = vst [vmem:[%s186 + $0x270] sm:$0xff] %v1305
        %1818 = vst [vmem:[%s186 + $0x278] sm:$0xff] %v1306
        %1819 = vst [vmem:[%s186 + $0x280] sm:$0xff] %v1307
        %1820 = vst [vmem:[%s186 + $0x288] sm:$0xff] %v1308
        %1821 = vst [vmem:[%s186 + $0x290] sm:$0xff] %v1309
        %1822 = vst [vmem:[%s186 + $0x298] sm:$0xff] %v1310
        %1823 = vst [vmem:[%s186 + $0x2a0] sm:$0xff] %v1311
        %1824 = vst [vmem:[%s186 + $0x2a8] sm:$0xff] %v1312
        %1825 = vst [vmem:[%s186 + $0x2b0] sm:$0xff] %v1313
        %1826 = vst [vmem:[%s186 + $0x2b8] sm:$0xff] %v1314
        %1827 = vst [vmem:[%s186 + $0x2c0] sm:$0xff] %v1315
        %1828 = vst [vmem:[%s186 + $0x2c8] sm:$0xff] %v1316
        %1829 = vst [vmem:[%s186 + $0x2d0] sm:$0xff] %v1317
        %1830 = vst [vmem:[%s186 + $0x2d8] sm:$0xff] %v1318
        %1831 = vst [vmem:[%s186 + $0x2e0] sm:$0xff] %v1319
        %1832 = vst [vmem:[%s186 + $0x2e8] sm:$0xff] %v1320
        %1833 = vst [vmem:[%s186 + $0x2f0] sm:$0xff] %v1321
        %1834 = vst [vmem:[%s186 + $0x2f8] sm:$0xff] %v1322
        %1835 = vst [vmem:[%s186 + $0x300] sm:$0xff] %v1323
        %1836 = vst [vmem:[%s186 + $0x308] sm:$0xff] %v1324
        %1837 = vst [vmem:[%s186 + $0x310] sm:$0xff] %v1325
        %1838 = vst [vmem:[%s186 + $0x318] sm:$0xff] %v1326
        %1839 = vst [vmem:[%s186 + $0x320] sm:$0xff] %v1327
        %1840 = vst [vmem:[%s186 + $0x328] sm:$0xff] %v1328
        %1841 = vst [vmem:[%s186 + $0x330] sm:$0xff] %v1329
        %1842 = vst [vmem:[%s186 + $0x338] sm:$0xff] %v1330
        %1843 = vst [vmem:[%s186 + $0x340] sm:$0xff] %v1331
        %1844 = vst [vmem:[%s186 + $0x348] sm:$0xff] %v1332
        %1845 = vst [vmem:[%s186 + $0x350] sm:$0xff] %v1333
        %1846 = vst [vmem:[%s186 + $0x358] sm:$0xff] %v1334
        %1847 = vst [vmem:[%s186 + $0x360] sm:$0xff] %v1335
        %1848 = vst [vmem:[%s186 + $0x368] sm:$0xff] %v1336
        %1849 = vst [vmem:[%s186 + $0x370] sm:$0xff] %v1337
        %1850 = vst [vmem:[%s186 + $0x378] sm:$0xff] %v1338
        %1851 = vst [vmem:[%s186 + $0x380] sm:$0xff] %v1339
        %1852 = vst [vmem:[%s186 + $0x388] sm:$0xff] %v1340
        %1853 = vst [vmem:[%s186 + $0x390] sm:$0xff] %v1341
        %1854 = vst [vmem:[%s186 + $0x398] sm:$0xff] %v1342
        %1855 = vst [vmem:[%s186 + $0x3a0] sm:$0xff] %v1343
        %1856 = vst [vmem:[%s186 + $0x3a8] sm:$0xff] %v1344
        %1857 = vst [vmem:[%s186 + $0x3b0] sm:$0xff] %v1345
        %1858 = vst [vmem:[%s186 + $0x3b8] sm:$0xff] %v1346
        %1859 = vst [vmem:[%s186 + $0x3c0] sm:$0xff] %v1347
        %1860 = vst [vmem:[%s186 + $0x3c8] sm:$0xff] %v1348
        %1861 = vst [vmem:[%s186 + $0x3d0] sm:$0xff] %v1349
        %1862 = vst [vmem:[%s186 + $0x3d8] sm:$0xff] %v1350
        %1863 = vst [vmem:[%s186 + $0x3e0] sm:$0xff] %v1351
        %1864 = vst [vmem:[%s186 + $0x3e8] sm:$0xff] %v1352
        %1865 = vst [vmem:[%s186 + $0x3f0] sm:$0xff] %v1353
        %1866 = vst [vmem:[%s186 + $0x3f8] sm:$0xff] %v1354
        %1867 = vst [vmem:[%s186 + $0x400] sm:$0xff] %v1355
        %1868 = vst [vmem:[%s186 + $0x408] sm:$0xff] %v1356
        %1869 = vst [vmem:[%s186 + $0x410] sm:$0xff] %v1357
        %1870 = vst [vmem:[%s186 + $0x418] sm:$0xff] %v1358
        %1871 = vst [vmem:[%s186 + $0x420] sm:$0xff] %v1359
        %1872 = vst [vmem:[%s186 + $0x428] sm:$0xff] %v1360
        %1873 = vst [vmem:[%s186 + $0x430] sm:$0xff] %v1361
        %1874 = vst [vmem:[%s186 + $0x438] sm:$0xff] %v1362
        %1875 = vst [vmem:[%s186 + $0x440] sm:$0xff] %v1363
        %1876 = vst [vmem:[%s186 + $0x448] sm:$0xff] %v1364
        %1877 = vst [vmem:[%s186 + $0x450] sm:$0xff] %v1365
        %1878 = vst [vmem:[%s186 + $0x458] sm:$0xff] %v1366
        %1879 = vst [vmem:[%s186 + $0x460] sm:$0xff] %v1367
        %1880 = vst [vmem:[%s186 + $0x468] sm:$0xff] %v1368
        %1881 = vst [vmem:[%s186 + $0x470] sm:$0xff] %v1369
        %1882 = vst [vmem:[%s186 + $0x478] sm:$0xff] %v1370
        %1883 = vst [vmem:[%s186 + $0x480] sm:$0xff] %v1371
        %1884 = vst [vmem:[%s186 + $0x488] sm:$0xff] %v1372
        %1885 = vst [vmem:[%s186 + $0x490] sm:$0xff] %v1373
        %1886 = vst [vmem:[%s186 + $0x498] sm:$0xff] %v1374
        %1887 = vst [vmem:[%s186 + $0x4a0] sm:$0xff] %v1375
        %1888 = vst [vmem:[%s186 + $0x4a8] sm:$0xff] %v1376
        %1889 = vst [vmem:[%s186 + $0x4b0] sm:$0xff] %v1377
        %1890 = vst [vmem:[%s186 + $0x4b8] sm:$0xff] %v1378
        %1891 = vst [vmem:[%s186 + $0x4c0] sm:$0xff] %v1379
        %1892 = vst [vmem:[%s186 + $0x4c8] sm:$0xff] %v1380
        %1893 = vst [vmem:[%s186 + $0x4d0] sm:$0xff] %v1381
        %1894 = vst [vmem:[%s186 + $0x4d8] sm:$0xff] %v1382
        %1895 = vst [vmem:[%s186 + $0x4e0] sm:$0xff] %v1383
        %1896 = vst [vmem:[%s186 + $0x4e8] sm:$0xff] %v1384
        %1897 = vst [vmem:[%s186 + $0x4f0] sm:$0xff] %v1385
        %1898 = vst [vmem:[%s186 + $0x4f8] sm:$0xff] %v1386
        %1899 = vst [vmem:[%s186 + $0x500] sm:$0xff] %v1387
        %1900 = vst [vmem:[%s186 + $0x508] sm:$0xff] %v1388
        %1901 = vst [vmem:[%s186 + $0x510] sm:$0xff] %v1389
        %1902 = vst [vmem:[%s186 + $0x518] sm:$0xff] %v1390
        %1903 = vst [vmem:[%s186 + $0x520] sm:$0xff] %v1391
        %1904 = vst [vmem:[%s186 + $0x528] sm:$0xff] %v1392
        %1905 = vst [vmem:[%s186 + $0x530] sm:$0xff] %v1393
        %1906 = vst [vmem:[%s186 + $0x538] sm:$0xff] %v1394
        %1907 = vst [vmem:[%s186 + $0x540] sm:$0xff] %v1395
        %1908 = vst [vmem:[%s186 + $0x548] sm:$0xff] %v1396
        %1909 = vst [vmem:[%s186 + $0x550] sm:$0xff] %v1397
        %1910 = vst [vmem:[%s186 + $0x558] sm:$0xff] %v1398
        %1911 = vst [vmem:[%s186 + $0x560] sm:$0xff] %v1399
        %1912 = vst [vmem:[%s186 + $0x568] sm:$0xff] %v1400
        %1913 = vst [vmem:[%s186 + $0x570] sm:$0xff] %v1401
        %1914 = vst [vmem:[%s186 + $0x578] sm:$0xff] %v1402
        %1915 = vst [vmem:[%s186 + $0x580] sm:$0xff] %v1403
        %1916 = vst [vmem:[%s186 + $0x588] sm:$0xff] %v1404
        %1917 = vst [vmem:[%s186 + $0x590] sm:$0xff] %v1405
        %1918 = vst [vmem:[%s186 + $0x598] sm:$0xff] %v1406
        %1919 = vst [vmem:[%s186 + $0x5a0] sm:$0xff] %v1407
        %1920 = vst [vmem:[%s186 + $0x5a8] sm:$0xff] %v1408
        %1921 = vst [vmem:[%s186 + $0x5b0] sm:$0xff] %v1409
        %1922 = vst [vmem:[%s186 + $0x5b8] sm:$0xff] %v1410
        %1923 = vst [vmem:[%s186 + $0x5c0] sm:$0xff] %v1411
        %1924 = vst [vmem:[%s186 + $0x5c8] sm:$0xff] %v1412
        %1925 = vst [vmem:[%s186 + $0x5d0] sm:$0xff] %v1413
        %1926 = vst [vmem:[%s186 + $0x5d8] sm:$0xff] %v1414
        %1927 = vst [vmem:[%s186 + $0x5e0] sm:$0xff] %v1415
        %1928 = vst [vmem:[%s186 + $0x5e8] sm:$0xff] %v1416
        %1929 = vst [vmem:[%s186 + $0x5f0] sm:$0xff] %v1417
        %1930 = vst [vmem:[%s186 + $0x5f8] sm:$0xff] %v1418
        %1931 = vst [vmem:[%s186 + $0x600] sm:$0xff] %v1419
        %1932 = vst [vmem:[%s186 + $0x608] sm:$0xff] %v1420
        %1933 = vst [vmem:[%s186 + $0x610] sm:$0xff] %v1421
        %1934 = vst [vmem:[%s186 + $0x618] sm:$0xff] %v1422
        %1935 = vst [vmem:[%s186 + $0x620] sm:$0xff] %v1423
        %1936 = vst [vmem:[%s186 + $0x628] sm:$0xff] %v1424
        %1937 = vst [vmem:[%s186 + $0x630] sm:$0xff] %v1425
        %1938 = vst [vmem:[%s186 + $0x638] sm:$0xff] %v1426
        %1939 = vst [vmem:[%s186 + $0x640] sm:$0xff] %v1427
        %1940 = vst [vmem:[%s186 + $0x648] sm:$0xff] %v1428
        %1941 = vst [vmem:[%s186 + $0x650] sm:$0xff] %v1429
        %1942 = vst [vmem:[%s186 + $0x658] sm:$0xff] %v1430
        %1943 = vst [vmem:[%s186 + $0x660] sm:$0xff] %v1431
        %1944 = vst [vmem:[%s186 + $0x668] sm:$0xff] %v1432
        %1945 = vst [vmem:[%s186 + $0x670] sm:$0xff] %v1433
        %1946 = vst [vmem:[%s186 + $0x678] sm:$0xff] %v1434
        %1947 = vst [vmem:[%s186 + $0x680] sm:$0xff] %v1435
        %1948 = vst [vmem:[%s186 + $0x688] sm:$0xff] %v1436
        %1949 = vst [vmem:[%s186 + $0x690] sm:$0xff] %v1437
        %1950 = vst [vmem:[%s186 + $0x698] sm:$0xff] %v1438
        %1951 = vst [vmem:[%s186 + $0x6a0] sm:$0xff] %v1439
        %1952 = vst [vmem:[%s186 + $0x6a8] sm:$0xff] %v1440
        %1953 = vst [vmem:[%s186 + $0x6b0] sm:$0xff] %v1441
        %1954 = vst [vmem:[%s186 + $0x6b8] sm:$0xff] %v1442
        %1955 = vst [vmem:[%s186 + $0x6c0] sm:$0xff] %v1443
        %1956 = vst [vmem:[%s186 + $0x6c8] sm:$0xff] %v1444
        %1957 = vst [vmem:[%s186 + $0x6d0] sm:$0xff] %v1445
        %1958 = vst [vmem:[%s186 + $0x6d8] sm:$0xff] %v1446
        %1959 = vst [vmem:[%s186 + $0x6e0] sm:$0xff] %v1447
        %1960 = vst [vmem:[%s186 + $0x6e8] sm:$0xff] %v1448
        %1961 = vst [vmem:[%s186 + $0x6f0] sm:$0xff] %v1449
        %1962 = vst [vmem:[%s186 + $0x6f8] sm:$0xff] %v1450
        %1963 = vst [vmem:[%s186 + $0x700] sm:$0xff] %v1451
        %1964 = vst [vmem:[%s186 + $0x708] sm:$0xff] %v1452
        %1965 = vst [vmem:[%s186 + $0x710] sm:$0xff] %v1453
        %1966 = vst [vmem:[%s186 + $0x718] sm:$0xff] %v1454
        %1967 = vst [vmem:[%s186 + $0x720] sm:$0xff] %v1455
        %1968 = vst [vmem:[%s186 + $0x728] sm:$0xff] %v1456
        %1969 = vst [vmem:[%s186 + $0x730] sm:$0xff] %v1457
        %1970 = vst [vmem:[%s186 + $0x738] sm:$0xff] %v1458
        %1971 = vst [vmem:[%s186 + $0x740] sm:$0xff] %v1459
        %1972 = vst [vmem:[%s186 + $0x748] sm:$0xff] %v1460
        %1973 = vst [vmem:[%s186 + $0x750] sm:$0xff] %v1461
        %1974 = vst [vmem:[%s186 + $0x758] sm:$0xff] %v1462
        %1975 = vst [vmem:[%s186 + $0x760] sm:$0xff] %v1463
        %1976 = vst [vmem:[%s186 + $0x768] sm:$0xff] %v1464
        %1977 = vst [vmem:[%s186 + $0x770] sm:$0xff] %v1465
        %1978 = vst [vmem:[%s186 + $0x778] sm:$0xff] %v1466
        %1979 = vst [vmem:[%s186 + $0x780] sm:$0xff] %v1467
        %1980 = vst [vmem:[%s186 + $0x788] sm:$0xff] %v1468
        %1981 = vst [vmem:[%s186 + $0x790] sm:$0xff] %v1469
        %1982 = vst [vmem:[%s186 + $0x798] sm:$0xff] %v1470
        %1983 = vst [vmem:[%s186 + $0x7a0] sm:$0xff] %v1471
        %1984 = vst [vmem:[%s186 + $0x7a8] sm:$0xff] %v1472
        %1985 = vst [vmem:[%s186 + $0x7b0] sm:$0xff] %v1473
        %1986 = vst [vmem:[%s186 + $0x7b8] sm:$0xff] %v1474
        %1987 = vst [vmem:[%s186 + $0x7c0] sm:$0xff] %v1475
        %1988 = vst [vmem:[%s186 + $0x7c8] sm:$0xff] %v1476
        %1989 = vst [vmem:[%s186 + $0x7d0] sm:$0xff] %v1477
        %1990 = vst [vmem:[%s186 + $0x7d8] sm:$0xff] %v1478
        %1991 = vst [vmem:[%s186 + $0x7e0] sm:$0xff] %v1479
        %1992 = vst [vmem:[%s186 + $0x7e8] sm:$0xff] %v1480
        %1993 = vst [vmem:[%s186 + $0x7f0] sm:$0xff] %v1481
        %1994 = vst [vmem:[%s186 + $0x7f8] sm:$0xff] %v1482
        %1995 = vst [vmem:[%s186 + $0x800] sm:$0xff] %v1483
        %1996 = vst [vmem:[%s186 + $0x808] sm:$0xff] %v1484
        %1997 = vst [vmem:[%s186 + $0x810] sm:$0xff] %v1485
        %1998 = vst [vmem:[%s186 + $0x818] sm:$0xff] %v1486
        %1999 = vst [vmem:[%s186 + $0x820] sm:$0xff] %v1487
        %2000 = vst [vmem:[%s186 + $0x828] sm:$0xff] %v1488
        %2001 = vst [vmem:[%s186 + $0x830] sm:$0xff] %v1489
        %2002 = vst [vmem:[%s186 + $0x838] sm:$0xff] %v1490
        %2003 = vst [vmem:[%s186 + $0x840] sm:$0xff] %v1491
        %2004 = vst [vmem:[%s186 + $0x848] sm:$0xff] %v1492
        %2005 = vst [vmem:[%s186 + $0x850] sm:$0xff] %v1493
        %2006 = vst [vmem:[%s186 + $0x858] sm:$0xff] %v1494
        %2007 = vst [vmem:[%s186 + $0x860] sm:$0xff] %v1495
        %2008 = vst [vmem:[%s186 + $0x868] sm:$0xff] %v1496
        %2009 = vst [vmem:[%s186 + $0x870] sm:$0xff] %v1497
        %2010 = vst [vmem:[%s186 + $0x878] sm:$0xff] %v1498
        %2011 = vst [vmem:[%s186 + $0x880] sm:$0xff] %v1499
        %2012 = vst [vmem:[%s186 + $0x888] sm:$0xff] %v1500
        %2013 = vst [vmem:[%s186 + $0x890] sm:$0xff] %v1501
        %2014 = vst [vmem:[%s186 + $0x898] sm:$0xff] %v1502
        %2015 = vst [vmem:[%s186 + $0x8a0] sm:$0xff] %v1503
        %2016 = vst [vmem:[%s186 + $0x8a8] sm:$0xff] %v1504
        %2017 = vst [vmem:[%s186 + $0x8b0] sm:$0xff] %v1505
        %2018 = vst [vmem:[%s186 + $0x8b8] sm:$0xff] %v1506
        %2019 = vst [vmem:[%s186 + $0x8c0] sm:$0xff] %v1507
        %2020 = vst [vmem:[%s186 + $0x8c8] sm:$0xff] %v1508
        %2021 = vst [vmem:[%s186 + $0x8d0] sm:$0xff] %v1509
        %2022 = vst [vmem:[%s186 + $0x8d8] sm:$0xff] %v1510
        %2023 = vst [vmem:[%s186 + $0x8e0] sm:$0xff] %v1511
        %2024 = vst [vmem:[%s186 + $0x8e8] sm:$0xff] %v1512
        %2025 = vst [vmem:[%s186 + $0x8f0] sm:$0xff] %v1513
        %2026 = vst [vmem:[%s186 + $0x8f8] sm:$0xff] %v1514
        %2027 = vst [vmem:[%s186 + $0x900] sm:$0xff] %v1515
        %2028 = vst [vmem:[%s186 + $0x908] sm:$0xff] %v1516
        %2029 = vst [vmem:[%s186 + $0x910] sm:$0xff] %v1517
        %2030 = vst [vmem:[%s186 + $0x918] sm:$0xff] %v1518
        %2031 = vst [vmem:[%s186 + $0x920] sm:$0xff] %v1519
        %2032 = vst [vmem:[%s186 + $0x928] sm:$0xff] %v1520
        %2033 = vst [vmem:[%s186 + $0x930] sm:$0xff] %v1521
        %2034 = vst [vmem:[%s186 + $0x938] sm:$0xff] %v1522
        %2035 = vst [vmem:[%s186 + $0x940] sm:$0xff] %v1523
        %2036 = vst [vmem:[%s186 + $0x948] sm:$0xff] %v1524
        %2037 = vst [vmem:[%s186 + $0x950] sm:$0xff] %v1525
        %2038 = vst [vmem:[%s186 + $0x958] sm:$0xff] %v1526
        %2039 = vst [vmem:[%s186 + $0x960] sm:$0xff] %v1527
        %2040 = vst [vmem:[%s186 + $0x968] sm:$0xff] %v1528
        %2041 = vst [vmem:[%s186 + $0x970] sm:$0xff] %v1529
        %2042 = vst [vmem:[%s186 + $0x978] sm:$0xff] %v1530
        %2043 = vst [vmem:[%s186 + $0x980] sm:$0xff] %v1531
        %2044 = vst [vmem:[%s186 + $0x988] sm:$0xff] %v1532
        %2045 = vst [vmem:[%s186 + $0x990] sm:$0xff] %v1533
        %2046 = vst [vmem:[%s186 + $0x998] sm:$0xff] %v1534
        %2047 = vst [vmem:[%s186 + $0x9a0] sm:$0xff] %v1535
        %2048 = vst [vmem:[%s186 + $0x9a8] sm:$0xff] %v1536
        %2049 = vst [vmem:[%s186 + $0x9b0] sm:$0xff] %v1537
        %2050 = vst [vmem:[%s186 + $0x9b8] sm:$0xff] %v1538
        %2051 = vst [vmem:[%s186 + $0x9c0] sm:$0xff] %v1539
        %2052 = vst [vmem:[%s186 + $0x9c8] sm:$0xff] %v1540
        %2053 = vst [vmem:[%s186 + $0x9d0] sm:$0xff] %v1541
        %2054 = vst [vmem:[%s186 + $0x9d8] sm:$0xff] %v1542
        %2055 = vst [vmem:[%s186 + $0x9e0] sm:$0xff] %v1543
        %2056 = vst [vmem:[%s186 + $0x9e8] sm:$0xff] %v1544
        %2057 = vst [vmem:[%s186 + $0x9f0] sm:$0xff] %v1545
        %2058 = vst [vmem:[%s186 + $0x9f8] sm:$0xff] %v1546
        %2059 = vst [vmem:[%s186 + $0xa00] sm:$0xff] %v1547
        %2060 = vst [vmem:[%s186 + $0xa08] sm:$0xff] %v1548
        %2061 = vst [vmem:[%s186 + $0xa10] sm:$0xff] %v1549
        %2062 = vst [vmem:[%s186 + $0xa18] sm:$0xff] %v1550
        %2063 = vst [vmem:[%s186 + $0xa20] sm:$0xff] %v1551
        %2064 = vst [vmem:[%s186 + $0xa28] sm:$0xff] %v1552
        %2065 = vst [vmem:[%s186 + $0xa30] sm:$0xff] %v1553
        %2066 = vst [vmem:[%s186 + $0xa38] sm:$0xff] %v1554
        %2067 = vst [vmem:[%s186 + $0xa40] sm:$0xff] %v1555
        %2068 = vst [vmem:[%s186 + $0xa48] sm:$0xff] %v1556
        %2069 = vst [vmem:[%s186 + $0xa50] sm:$0xff] %v1557
        %2070 = vst [vmem:[%s186 + $0xa58] sm:$0xff] %v1558
        %2071 = vst [vmem:[%s186 + $0xa60] sm:$0xff] %v1559
        %2072 = vst [vmem:[%s186 + $0xa68] sm:$0xff] %v1560
        %2073 = vst [vmem:[%s186 + $0xa70] sm:$0xff] %v1561
        %2074 = vst [vmem:[%s186 + $0xa78] sm:$0xff] %v1562
        %2075 = vst [vmem:[%s186 + $0xa80] sm:$0xff] %v1563
        %2076 = vst [vmem:[%s186 + $0xa88] sm:$0xff] %v1564
        %2077 = vst [vmem:[%s186 + $0xa90] sm:$0xff] %v1565
        %2078 = vst [vmem:[%s186 + $0xa98] sm:$0xff] %v1566
        %2079 = vst [vmem:[%s186 + $0xaa0] sm:$0xff] %v1567
        %2080 = vst [vmem:[%s186 + $0xaa8] sm:$0xff] %v1568
        %2081 = vst [vmem:[%s186 + $0xab0] sm:$0xff] %v1569
        %2082 = vst [vmem:[%s186 + $0xab8] sm:$0xff] %v1570
        %2083 = vst [vmem:[%s186 + $0xac0] sm:$0xff] %v1571
        %2084 = vst [vmem:[%s186 + $0xac8] sm:$0xff] %v1572
        %2085 = vst [vmem:[%s186 + $0xad0] sm:$0xff] %v1573
        %2086 = vst [vmem:[%s186 + $0xad8] sm:$0xff] %v1574
        %2087 = vst [vmem:[%s186 + $0xae0] sm:$0xff] %v1575
        %2088 = vst [vmem:[%s186 + $0xae8] sm:$0xff] %v1576
        %2089 = vst [vmem:[%s186 + $0xaf0] sm:$0xff] %v1577
        %2090 = vst [vmem:[%s186 + $0xaf8] sm:$0xff] %v1578
        %2091 = vst [vmem:[%s186 + $0xb00] sm:$0xff] %v1579
        %2092 = vst [vmem:[%s186 + $0xb08] sm:$0xff] %v1580
        %2093 = vst [vmem:[%s186 + $0xb10] sm:$0xff] %v1581
        %2094 = vst [vmem:[%s186 + $0xb18] sm:$0xff] %v1582
        %2095 = vst [vmem:[%s186 + $0xb20] sm:$0xff] %v1583
        %2096 = vst [vmem:[%s186 + $0xb28] sm:$0xff] %v1584
        %2097 = vst [vmem:[%s186 + $0xb30] sm:$0xff] %v1585
        %2098 = vst [vmem:[%s186 + $0xb38] sm:$0xff] %v1586
        %2099 = vst [vmem:[%s186 + $0xb40] sm:$0xff] %v1587
        %2100 = vst [vmem:[%s186 + $0xb48] sm:$0xff] %v1588
        %2101 = vst [vmem:[%s186 + $0xb50] sm:$0xff] %v1589
        %2102 = vst [vmem:[%s186 + $0xb58] sm:$0xff] %v1590
        %2103 = vst [vmem:[%s186 + $0xb60] sm:$0xff] %v1591
        %2104 = vst [vmem:[%s186 + $0xb68] sm:$0xff] %v1592
        %2105 = vst [vmem:[%s186 + $0xb70] sm:$0xff] %v1593
        %2106 = vst [vmem:[%s186 + $0xb78] sm:$0xff] %v1594
        %2107 = vst [vmem:[%s186 + $0xb80] sm:$0xff] %v1595
        %2108 = vst [vmem:[%s186 + $0xb88] sm:$0xff] %v1596
        %2109 = vst [vmem:[%s186 + $0xb90] sm:$0xff] %v1597
        %2110 = vst [vmem:[%s186 + $0xb98] sm:$0xff] %v1598
        %2111 = vst [vmem:[%s186 + $0xba0] sm:$0xff] %v1599
        %2112 = vst [vmem:[%s186 + $0xba8] sm:$0xff] %v1600
        %2113 = vst [vmem:[%s186 + $0xbb0] sm:$0xff] %v1601
        %2114 = vst [vmem:[%s186 + $0xbb8] sm:$0xff] %v1602
        %2115 = vst [vmem:[%s186 + $0xbc0] sm:$0xff] %v1603
        %2116 = vst [vmem:[%s186 + $0xbc8] sm:$0xff] %v1604
        %2117 = vst [vmem:[%s186 + $0xbd0] sm:$0xff] %v1605
        %2118 = vst [vmem:[%s186 + $0xbd8] sm:$0xff] %v1606
        %2119 = vst [vmem:[%s186 + $0xbe0] sm:$0xff] %v1607
        %2120 = vst [vmem:[%s186 + $0xbe8] sm:$0xff] %v1608
        %2121 = vst [vmem:[%s186 + $0xbf0] sm:$0xff] %v1609
        %2122 = vst [vmem:[%s186 + $0xbf8] sm:$0xff] %v1610
        %2123 = vst [vmem:[%s186 + $0xc00] sm:$0xff] %v1611
        %2124 = vst [vmem:[%s186 + $0xc08] sm:$0xff] %v1612
        %2125 = vst [vmem:[%s186 + $0xc10] sm:$0xff] %v1613
        %2126 = vst [vmem:[%s186 + $0xc18] sm:$0xff] %v1614
        %2127 = vst [vmem:[%s186 + $0xc20] sm:$0xff] %v1615
        %2128 = vst [vmem:[%s186 + $0xc28] sm:$0xff] %v1616
        %2129 = vst [vmem:[%s186 + $0xc30] sm:$0xff] %v1617
        %2130 = vst [vmem:[%s186 + $0xc38] sm:$0xff] %v1618
        %2131 = vst [vmem:[%s186 + $0xc40] sm:$0xff] %v1619
        %2132 = vst [vmem:[%s186 + $0xc48] sm:$0xff] %v1620
        %2133 = vst [vmem:[%s186 + $0xc50] sm:$0xff] %v1621
        %2134 = vst [vmem:[%s186 + $0xc58] sm:$0xff] %v1622
        %2135 = vst [vmem:[%s186 + $0xc60] sm:$0xff] %v1623
        %2136 = vst [vmem:[%s186 + $0xc68] sm:$0xff] %v1624
        %2137 = vst [vmem:[%s186 + $0xc70] sm:$0xff] %v1625
        %2138 = vst [vmem:[%s186 + $0xc78] sm:$0xff] %v1626
        %2139 = vst [vmem:[%s186 + $0xc80] sm:$0xff] %v1627
        %2140 = vst [vmem:[%s186 + $0xc88] sm:$0xff] %v1628
        %2141 = vst [vmem:[%s186 + $0xc90] sm:$0xff] %v1629
        %2142 = vst [vmem:[%s186 + $0xc98] sm:$0xff] %v1630
        %2143 = vst [vmem:[%s186 + $0xca0] sm:$0xff] %v1631
        %2144 = vst [vmem:[%s186 + $0xca8] sm:$0xff] %v1632
        %2145 = vst [vmem:[%s186 + $0xcb0] sm:$0xff] %v1633
        %2146 = vst [vmem:[%s186 + $0xcb8] sm:$0xff] %v1634
        %2147 = vst [vmem:[%s186 + $0xcc0] sm:$0xff] %v1635
        %2148 = vst [vmem:[%s186 + $0xcc8] sm:$0xff] %v1636
        %2149 = vst [vmem:[%s186 + $0xcd0] sm:$0xff] %v1637
        %2150 = vst [vmem:[%s186 + $0xcd8] sm:$0xff] %v1638
        %2151 = vst [vmem:[%s186 + $0xce0] sm:$0xff] %v1639
        %2152 = vst [vmem:[%s186 + $0xce8] sm:$0xff] %v1640
        %2153 = vst [vmem:[%s186 + $0xcf0] sm:$0xff] %v1641
        %2154 = vst [vmem:[%s186 + $0xcf8] sm:$0xff] %v1642
        %2155 = vst [vmem:[%s186 + $0xd00] sm:$0xff] %v1643
        %2156 = vst [vmem:[%s186 + $0xd08] sm:$0xff] %v1644
        %2157 = vst [vmem:[%s186 + $0xd10] sm:$0xff] %v1645
        %2158 = vst [vmem:[%s186 + $0xd18] sm:$0xff] %v1646
        %2159 = vst [vmem:[%s186 + $0xd20] sm:$0xff] %v1647
        %2160 = vst [vmem:[%s186 + $0xd28] sm:$0xff] %v1648
        %2161 = vst [vmem:[%s186 + $0xd30] sm:$0xff] %v1649
        %2162 = vst [vmem:[%s186 + $0xd38] sm:$0xff] %v1650
        %2163 = vst [vmem:[%s186 + $0xd40] sm:$0xff] %v1651
        %2164 = vst [vmem:[%s186 + $0xd48] sm:$0xff] %v1652
        %2165 = vst [vmem:[%s186 + $0xd50] sm:$0xff] %v1653
        %2166 = vst [vmem:[%s186 + $0xd58] sm:$0xff] %v1654
        %2167 = vst [vmem:[%s186 + $0xd60] sm:$0xff] %v1655
        %2168 = vst [vmem:[%s186 + $0xd68] sm:$0xff] %v1656
        %2169 = vst [vmem:[%s186 + $0xd70] sm:$0xff] %v1657
        %2170 = vst [vmem:[%s186 + $0xd78] sm:$0xff] %v1658
        %2171 = vst [vmem:[%s186 + $0xd80] sm:$0xff] %v1659
        %2172 = vst [vmem:[%s186 + $0xd88] sm:$0xff] %v1660
        %2173 = vst [vmem:[%s186 + $0xd90] sm:$0xff] %v1661
        %2174 = vst [vmem:[%s186 + $0xd98] sm:$0xff] %v1662
        %2175 = vst [vmem:[%s186 + $0xda0] sm:$0xff] %v1663
        %2176 = vst [vmem:[%s186 + $0xda8] sm:$0xff] %v1664
        %2177 = vst [vmem:[%s186 + $0xdb0] sm:$0xff] %v1665
        %2178 = vst [vmem:[%s186 + $0xdb8] sm:$0xff] %v1666
        %2179 = vst [vmem:[%s186 + $0xdc0] sm:$0xff] %v1667
        %2180 = vst [vmem:[%s186 + $0xdc8] sm:$0xff] %v1668
        %2181 = vst [vmem:[%s186 + $0xdd0] sm:$0xff] %v1669
        %2182 = vst [vmem:[%s186 + $0xdd8] sm:$0xff] %v1670
        %2183 = vst [vmem:[%s186 + $0xde0] sm:$0xff] %v1671
        %2184 = vst [vmem:[%s186 + $0xde8] sm:$0xff] %v1672
        %2185 = vst [vmem:[%s186 + $0xdf0] sm:$0xff] %v1673
        %2186 = vst [vmem:[%s186 + $0xdf8] sm:$0xff] %v1674
        %2187 = vst [vmem:[%s186 + $0xe00] sm:$0xff] %v1675
        %2188 = vst [vmem:[%s186 + $0xe08] sm:$0xff] %v1676
        %2189 = vst [vmem:[%s186 + $0xe10] sm:$0xff] %v1677
        %2190 = vst [vmem:[%s186 + $0xe18] sm:$0xff] %v1678
        %2191 = vst [vmem:[%s186 + $0xe20] sm:$0xff] %v1679
        %2192 = vst [vmem:[%s186 + $0xe28] sm:$0xff] %v1680
        %2193 = vst [vmem:[%s186 + $0xe30] sm:$0xff] %v1681
        %2194 = vst [vmem:[%s186 + $0xe38] sm:$0xff] %v1682
        %2195 = vst [vmem:[%s186 + $0xe40] sm:$0xff] %v1683
        %2196 = vst [vmem:[%s186 + $0xe48] sm:$0xff] %v1684
        %2197 = vst [vmem:[%s186 + $0xe50] sm:$0xff] %v1685
        %2198 = vst [vmem:[%s186 + $0xe58] sm:$0xff] %v1686
        %2199 = vst [vmem:[%s186 + $0xe60] sm:$0xff] %v1687
        %2200 = vst [vmem:[%s186 + $0xe68] sm:$0xff] %v1688
        %2201 = vst [vmem:[%s186 + $0xe70] sm:$0xff] %v1689
        %2202 = vst [vmem:[%s186 + $0xe78] sm:$0xff] %v1690
        %2203 = vst [vmem:[%s186 + $0xe80] sm:$0xff] %v1691
        %2204 = vst [vmem:[%s186 + $0xe88] sm:$0xff] %v1692
        %2205 = vst [vmem:[%s186 + $0xe90] sm:$0xff] %v1693
        %2206 = vst [vmem:[%s186 + $0xe98] sm:$0xff] %v1694
        %2207 = vst [vmem:[%s186 + $0xea0] sm:$0xff] %v1695
        %2208 = vst [vmem:[%s186 + $0xea8] sm:$0xff] %v1696
        %2209 = vst [vmem:[%s186 + $0xeb0] sm:$0xff] %v1697
        %2210 = vst [vmem:[%s186 + $0xeb8] sm:$0xff] %v1698
        %2211 = vst [vmem:[%s186 + $0xec0] sm:$0xff] %v1699
        %2212 = vst [vmem:[%s186 + $0xec8] sm:$0xff] %v1700
        %2213 = vst [vmem:[%s186 + $0xed0] sm:$0xff] %v1701
        %2214 = vst [vmem:[%s186 + $0xed8] sm:$0xff] %v1702
        %2215 = vst [vmem:[%s186 + $0xee0] sm:$0xff] %v1703
        %2216 = vst [vmem:[%s186 + $0xee8] sm:$0xff] %v1704
        %2217 = vst [vmem:[%s186 + $0xef0] sm:$0xff] %v1705
        %2218 = vst [vmem:[%s186 + $0xef8] sm:$0xff] %v1706
        %2219 = vst [vmem:[%s186 + $0xf00] sm:$0xff] %v1707
        %2220 = vst [vmem:[%s186 + $0xf08] sm:$0xff] %v1708
        %2221 = vst [vmem:[%s186 + $0xf10] sm:$0xff] %v1709
        %2222 = vst [vmem:[%s186 + $0xf18] sm:$0xff] %v1710
        %2223 = vst [vmem:[%s186 + $0xf20] sm:$0xff] %v1711
        %2224 = vst [vmem:[%s186 + $0xf28] sm:$0xff] %v1712
        %2225 = vst [vmem:[%s186 + $0xf30] sm:$0xff] %v1713
        %2226 = vst [vmem:[%s186 + $0xf38] sm:$0xff] %v1714
        %2227 = vst [vmem:[%s186 + $0xf40] sm:$0xff] %v1715
        %2228 = vst [vmem:[%s186 + $0xf48] sm:$0xff] %v1716
        %2229 = vst [vmem:[%s186 + $0xf50] sm:$0xff] %v1717
        %2230 = vst [vmem:[%s186 + $0xf58] sm:$0xff] %v1718
        %2231 = vst [vmem:[%s186 + $0xf60] sm:$0xff] %v1719
        %2232 = vst [vmem:[%s186 + $0xf68] sm:$0xff] %v1720
        %2233 = vst [vmem:[%s186 + $0xf70] sm:$0xff] %v1721
        %2234 = vst [vmem:[%s186 + $0xf78] sm:$0xff] %v1722
        %2235 = vst [vmem:[%s186 + $0xf80] sm:$0xff] %v1723
        %2236 = vst [vmem:[%s186 + $0xf88] sm:$0xff] %v1724
        %2237 = vst [vmem:[%s186 + $0xf90] sm:$0xff] %v1725
        %2238 = vst [vmem:[%s186 + $0xf98] sm:$0xff] %v1726
        %2239 = vst [vmem:[%s186 + $0xfa0] sm:$0xff] %v1727
        %2240 = vst [vmem:[%s186 + $0xfa8] sm:$0xff] %v1728
        %2241 = vst [vmem:[%s186 + $0xfb0] sm:$0xff] %v1729
        %2242 = vst [vmem:[%s186 + $0xfb8] sm:$0xff] %v1730
        %2243 = vst [vmem:[%s186 + $0xfc0] sm:$0xff] %v1731
        %2244 = vst [vmem:[%s186 + $0xfc8] sm:$0xff] %v1732
        %2245 = vst [vmem:[%s186 + $0xfd0] sm:$0xff] %v1733
        %2246 = vst [vmem:[%s186 + $0xfd8] sm:$0xff] %v1734
        %2247 = vst [vmem:[%s186 + $0xfe0] sm:$0xff] %v1735
        %2248 = vst [vmem:[%s186 + $0xfe8] sm:$0xff] %v1736
        %2249 = vst [vmem:[%s186 + $0xff0] sm:$0xff] %v1737
        %2250 = vst [vmem:[%s186 + $0xff8] sm:$0xff] %v1738
        %s2251 = sand.u32 %s75, 1
        %s2252 = scalar_lea.sflag [#allocation4], %s2251
        %s2253 = sand.u32 %s75, 1
        %s2254 = smul.addr %s2253, 4096
        %s2255 = scalar_lea.vmem [#allocation7], %s2254
        // Predicated region
        $region37: #{tpu_custom_call.1} parent=27 // pred_check
          %p2256 = pneg %p85
        $region38: #{tpu_custom_call.1} parent=27 // pred_check_branch
          %2258 = sbr.rel (%p2256) target = $region40
        $region39: #{tpu_custom_call.1} parent=27 // pred_region
          %s2259 = smul.u32 16, %s20
          %s2260 = ssub.s32 24, %s2259
          %p2261 = scmp.lt.s32.totalorder %s2260, 16
          %s2262 = scalar_select %p2261, %s2260, 16
          %s2263 = smul.u32 8, %s2262
          %s2264 = smul.u32 %s2263, 32
          %s2265 = ssub.s32 4096, %s2264
          %s2266 = sshll.u32 %s2265, 4
          %2267 = vsyncadd %s2252, %s2266
          %p2268 = scmp.ne.s32.totalorder 0, %s2264
          %s2269 = smul.addr %s2259, 32
          %s2270 = smul.addr %s2269, 8
          %s2271 = scalar_lea.hbm %s2, %s2270
          %s2272 = smul.u32 256, %s2262
          %s2273 = sshll.u32 %s2255, 4
          %s2274 = int_to_ptr.vmem [resolvable:$true] %s2273
          %s2275 = sshll.u32 %s2271, 4
          %s2276 = int_to_ptr.hbm [resolvable:$true] %s2275
          %s2277 = sshll.u32 %s2272, 4
          %2281 = dma.vmem_to_hbm [thread:$0]  (%p2268), %s2274, %s2277, %s2276, %s2252, 4096, 4096, 256
        $region40: #{tpu_custom_call.1} parent=27 // pred_fallthru
          _
      $region28: #{tpu_custom_call.1} parent=5 // pred_fallthru
        _
      %p2282 = scmp.le.s32.totalorder 2, %s15
      // Predicated region
      $region41: #{tpu_custom_call.1} parent=5 // pred_check
        %p2283 = pneg %p2282
      $region42: #{tpu_custom_call.1} parent=5 // pred_check_branch
        %2285 = sbr.rel (%p2283) target = $region44
      $region43: #{tpu_custom_call.1} parent=5 // pred_region
        %s2286 = ssub.s32 %s15, 2
        // Predicated region
        $region45: #{tpu_custom_call.1} parent=43 // pred_check
          %p2287 = pneg %p91
        $region46: #{tpu_custom_call.1} parent=43 // pred_check_branch
          %2289 = sbr.rel (%p2287) target = $region48
        $region47: #{tpu_custom_call.1} parent=43 // pred_region
          %s2290 = sand.u32 %s76, 1
          %s2291 = scalar_lea.sflag [#allocation4], %s2290
          %s2292 = sand.u32 %s76, 1
          %s2293 = smul.addr %s2292, 4096
          %s2294 = scalar_lea.vmem [#allocation7], %s2293
          %2296 = dma.done %s2291, 65536
        $region48: #{tpu_custom_call.1} parent=43 // pred_fallthru
          _
      $region44: #{tpu_custom_call.1} parent=5 // pred_fallthru
        _
    $region6: #{tpu_custom_call.1} parent=1 // loop_footer
      %s19 = sadd.s32 1, %s15
    $region7: #{tpu_custom_call.1} parent=1 // loop_footer_branch
      %14 = sbr.rel target = $region3
    $region8: #{tpu_custom_call.1} parent=1 // loop_exit
      _
    %2297 = vsyncpa [#allocation3], 1
    %s2298 = scalar_lea.sflag [#allocation3], 1
    %2299 = vsyncpa %s2298, 1
    %2300 = vsyncpa [#allocation4], 1
    %s2301 = scalar_lea.sflag [#allocation4], 1
    %2302 = vsyncpa %s2301, 1
    %2303 = vsyncpa [#allocation5], 1
    %s2304 = scalar_lea.sflag [#allocation5], 1
    %2305 = vsyncpa %s2304, 1

</llo_original>
